<compile_context>
chip_gen: v7x
topology: tpu7x:2x2x1
jax: 0.10.0
libtpu: 0.0.40
codegen_flags: <defaults>
</compile_context>

<pallas_src>
import jax
import jax.numpy as jnp
from jax import lax
from jax.experimental import pallas as pl
from jax.experimental.pallas import tpu as pltpu

HIDDEN = 32
INPUT = 5
G = 4 * HIDDEN          # 128 gate lanes per direction (lane-dense)
OUT_LANES = 128         # padded head output width: prefix -> lanes 0:5, suffix -> 5:10


def _round_up(n, m):
    return (n + m - 1) // m * m


def _pick_tile_b(B, T):
    """Largest batch tile (multiple of 8, <= 256) whose double-buffered gate
    stream stays well under ~24 MiB, safe for v7x's 64 MiB VMEM / 32 MiB scoped
    default as well as v5e/v6e."""
    b8 = _round_up(B, 8)
    budget = 24 * 1024 * 1024
    for tile in (256, 128, 64, 32, 16, 8):
        if tile <= b8 and 2 * T * tile * G * 4 <= budget:
            return tile
    return 8


# ----------------------------------------------------------------------------
# Kernel
# ----------------------------------------------------------------------------
def psrnn_kernel(gxf_ref, gxb_ref, len_ref, h0_ref, c0_ref,
                 whh_ref, w1_ref, b1_ref, w2_ref, b2_ref, w3_ref, b3_ref,
                 out_ref):
    T = gxf_ref.shape[0]
    H = HIDDEN
    lengths = len_ref[...]                          # (TILE_B, 1) int32
    h0 = h0_ref[...]                                # (TILE_B, 32)
    c0 = c0_ref[...]
    whh_f = whh_ref[:, :G]                          # (32, 128)
    whh_b = whh_ref[:, G:]                          # (32, 128)

    def lstm_step(gates_x, h, c, whh):
        # Input projection (x @ W_ih + b_ih + b_hh) is already folded into gates_x;
        # only the recurrent matmul sits on the serial dependency chain.
        gates = gates_x + jnp.dot(h, whh, preferred_element_type=jnp.float32)
        # Two full-vreg transcendental passes, then cheap 32-lane slices.
        sig = jax.nn.sigmoid(gates)
        th = jnp.tanh(gates)
        i = sig[:, 0:H]
        f = sig[:, H:2 * H]
        o = sig[:, 3 * H:4 * H]
        g = th[:, 2 * H:3 * H]
        c_new = f * c + i * g
        h_new = o * jnp.tanh(c_new)
        return h_new, c_new

    def body(t, carry):
        h, c = carry
        h_new, c_new = lstm_step(gxf_ref[t], h, c, whh_f)
        mask = t < lengths                          # (TILE_B, 1) bool
        return jnp.where(mask, h_new, h), jnp.where(mask, c_new, c)

    # Unroll short recurrences fully so the LLO scheduler can overlap steps.
    h_fwd, _ = lax.fori_loop(0, T, body, (h0, c0),
                             unroll=True if T <= 16 else 8)

    # Backward direction: exactly one step on x[:, lengths-1] from (h0, c0),
    # which is what pad_packed_sequence exposes at t = lengths-1.
    h_bwd, _ = lstm_step(gxb_ref[...], h0, c0, whh_b)

    # Both heads fused.  feat = [h_fwd | h_bwd]: the lane concat is replaced by two
    # row-sliced matmuls into the shared (64, 256) first-layer weight; layers 2/3
    # use block-diagonal packed weights so each layer is a single MXU push.
    z1 = jnp.maximum(
        jnp.dot(h_fwd, w1_ref[0:H, :], preferred_element_type=jnp.float32)
        + jnp.dot(h_bwd, w1_ref[H:2 * H, :], preferred_element_type=jnp.float32)
        + b1_ref[...], 0.0)                                          # (TILE_B, 256)
    z2 = jnp.maximum(
        jnp.dot(z1, w2_ref[...], preferred_element_type=jnp.float32) + b2_ref[...],
        0.0)                                                         # (TILE_B, 128)
    out_ref[...] = jax.nn.sigmoid(
        jnp.dot(z2, w3_ref[...], preferred_element_type=jnp.float32) + b3_ref[...])


# ----------------------------------------------------------------------------
# Wrapper
# ----------------------------------------------------------------------------
@jax.jit
def psrnn_forward(x, lengths, sid, params):
    """x: (B, T, 5) f32, lengths: (B,) int32 (>= 1), sid: (B,) int32."""
    B, T, _ = x.shape
    H = HIDDEN
    TILE_B = _pick_tile_b(B, T)
    B_pad = _round_up(B, TILE_B)

    lengths = lengths.astype(jnp.int32)
    h0 = params["emb_h"][sid]                       # (B, 32)  embedding gather (glue)
    c0 = params["emb_c"][sid]                       # (B, 32)
    # lengths must be >= 1 (pack_padded_sequence requires it); clamp defensively.
    x_last = x[jnp.arange(B), jnp.maximum(lengths - 1, 0), :]     # (B, 5) gather (glue)

    # Hoisted input projections: one big lane-dense matmul each, biases folded in.
    gx_fwd = jnp.einsum("btf,fg->tbg", x, params["wih_f"]) + params["b_f"]   # (T, B, 128)
    gx_bwd = x_last @ params["wih_b"] + params["b_b"]                        # (B, 128)

    # Pad batch up to a multiple of TILE_B (padded rows are discarded at the end).
    padB = lambda a: jnp.pad(a, [(0, B_pad - B)] + [(0, 0)] * (a.ndim - 1))
    gx_fwd = jnp.pad(gx_fwd, ((0, 0), (0, B_pad - B), (0, 0)))
    gx_bwd = padB(gx_bwd)
    h0 = padB(h0)
    c0 = padB(c0)
    len2d = padB(lengths.reshape(B, 1))

    # Pack the many tiny operands into a few lane-dense blobs (fewer micro-DMAs).
    whh = jnp.concatenate([params["whh_f"], params["whh_b"]], axis=1)        # (32, 256)
    w1 = jnp.concatenate([params["wp1"], params["ws1"]], axis=1)             # (64, 256)
    b1 = jnp.concatenate([params["bp1"], params["bs1"]], axis=1)             # (1, 256)
    z2w = jnp.zeros_like(params["wp2"])
    w2 = jnp.concatenate(
        [jnp.concatenate([params["wp2"], z2w], axis=1),
         jnp.concatenate([z2w, params["ws2"]], axis=1)], axis=0)             # (256, 128)
    b2 = jnp.concatenate([params["bp2"], params["bs2"]], axis=1)             # (1, 128)
    w3 = jnp.zeros((4 * H, OUT_LANES), jnp.float32)
    w3 = w3.at[:2 * H, 0:5].set(params["wp3"]).at[2 * H:, 5:10].set(params["ws3"])
    b3 = jnp.zeros((1, OUT_LANES), jnp.float32)
    b3 = b3.at[:, 0:5].set(params["bp3"]).at[:, 5:10].set(params["bs3"])

    grid = (B_pad // TILE_B,)
    in_specs = [
        pl.BlockSpec((T, TILE_B, G), lambda i: (0, i, 0)),    # gate stream (fwd)
        pl.BlockSpec((TILE_B, G), lambda i: (i, 0)),          # gates for bwd step
        pl.BlockSpec((TILE_B, 1), lambda i: (i, 0)),          # lengths
        pl.BlockSpec((TILE_B, H), lambda i: (i, 0)),          # h0
        pl.BlockSpec((TILE_B, H), lambda i: (i, 0)),          # c0
        pl.BlockSpec((H, 2 * G), lambda i: (0, 0)),           # whh packed
        pl.BlockSpec((2 * H, 2 * G), lambda i: (0, 0)),       # head W1 packed
        pl.BlockSpec((1, 2 * G), lambda i: (0, 0)),           # head b1 packed
        pl.BlockSpec((2 * G, G), lambda i: (0, 0)),           # head W2 block-diag
        pl.BlockSpec((1, G), lambda i: (0, 0)),               # head b2 packed
        pl.BlockSpec((G, OUT_LANES), lambda i: (0, 0)),       # head W3 block-diag (padded)
        pl.BlockSpec((1, OUT_LANES), lambda i: (0, 0)),       # head b3 (padded)
    ]
    out = pl.pallas_call(
        psrnn_kernel,
        out_shape=jax.ShapeDtypeStruct((B_pad, OUT_LANES), jnp.float32),
        grid=grid,
        in_specs=in_specs,
        out_specs=pl.BlockSpec((TILE_B, OUT_LANES), lambda i: (i, 0)),
        compiler_params=pltpu.CompilerParams(dimension_semantics=("parallel",)),
    )(gx_fwd, gx_bwd, len2d, h0, c0, whh, w1, b1, w2, b2, w3, b3)

    prefix = out[:B, 0:5]
    suffix = out[:B, 5:10]
    return prefix, suffix


# ----------------------------------------------------------------------------
# Pure-JAX reference (mirrors the PyTorch forward, unpacked weights)
# ----------------------------------------------------------------------------
def _lstm_step_ref(x_t, h, c, wih, whh, b):
    H = HIDDEN
    gates = x_t @ wih + h @ whh + b
    i = jax.nn.sigmoid(gates[:, 0:H])
    f = jax.nn.sigmoid(gates[:, H:2 * H])
    g = jnp.tanh(gates[:, 2 * H:3 * H])
    o = jax.nn.sigmoid(gates[:, 3 * H:4 * H])
    c_new = f * c + i * g
    h_new = o * jnp.tanh(c_new)
    return h_new, c_new


def _mlp_ref(feat, w1, b1, w2, b2, w3, b3):
    z = jnp.maximum(feat @ w1 + b1, 0.0)
    z = jnp.maximum(z @ w2 + b2, 0.0)
    return jax.nn.sigmoid(z @ w3 + b3)


def psrnn_reference(x, lengths, sid, p):
    B, T, _ = x.shape
    h0 = p["emb_h"][sid]
    c0 = p["emb_c"][sid]
    h, c = h0, c0
    for t in range(T):
        hn, cn = _lstm_step_ref(x[:, t], h, c, p["wih_f"], p["whh_f"], p["b_f"])
        m = (t < lengths)[:, None]
        h = jnp.where(m, hn, h)
        c = jnp.where(m, cn, c)
    x_last = x[jnp.arange(B), jnp.maximum(lengths - 1, 0)]
    hb, _ = _lstm_step_ref(x_last, h0, c0, p["wih_b"], p["whh_b"], p["b_b"])
    feat = jnp.concatenate([h, hb], axis=-1)
    prefix = _mlp_ref(feat, p["wp1"], p["bp1"], p["wp2"], p["bp2"], p["wp3"], p["bp3"])
    suffix = _mlp_ref(feat, p["ws1"], p["bs1"], p["ws2"], p["bs2"], p["ws3"], p["bs3"])
    return prefix, suffix


def init_params(key, num_scenes=10):
    H = HIDDEN
    k = 1.0 / jnp.sqrt(jnp.float32(H))

    def u(key, shape):
        return jax.random.uniform(key, shape, jnp.float32, -k, k)

    keys = jax.random.split(key, 24)
    return {
        "emb_h": jax.random.normal(keys[0], (num_scenes, H), jnp.float32),
        "emb_c": jax.random.normal(keys[1], (num_scenes, H), jnp.float32),
        # LSTM weights stored (in, 4H); combined bias b_ih + b_hh as (1, 4H).
        "wih_f": u(keys[2], (INPUT, 4 * H)),
        "whh_f": u(keys[3], (H, 4 * H)),
        "b_f": u(keys[4], (1, 4 * H)) + u(keys[5], (1, 4 * H)),
        "wih_b": u(keys[6], (INPUT, 4 * H)),
        "whh_b": u(keys[7], (H, 4 * H)),
        "b_b": u(keys[8], (1, 4 * H)) + u(keys[9], (1, 4 * H)),
        # prefix header
        "wp1": u(keys[10], (2 * H, 128)), "bp1": u(keys[11], (1, 128)),
        "wp2": u(keys[12], (128, 2 * H)), "bp2": u(keys[13], (1, 2 * H)),
        "wp3": u(keys[14], (2 * H, 5)),   "bp3": u(keys[15], (1, 5)),
        # suffix header
        "ws1": u(keys[16], (2 * H, 128)), "bs1": u(keys[17], (1, 128)),
        "ws2": u(keys[18], (128, 2 * H)), "bs2": u(keys[19], (1, 2 * H)),
        "ws3": u(keys[20], (2 * H, 5)),   "bs3": u(keys[21], (1, 5)),
    }


if __name__ == "__main__":
    key = jax.random.PRNGKey(0)
    kp, kx = jax.random.split(key)
    params = init_params(kp, num_scenes=10)

    # Small case matching the module's natural shapes.
    B, T = 2, 8
    x = jax.random.normal(kx, (B, T, INPUT), jnp.float32)
    lengths = jnp.array([8, 5], dtype=jnp.int32)
    sid = jnp.array([3, 7], dtype=jnp.int32)

    prefix, suffix = psrnn_forward(x, lengths, sid, params)
    jax.block_until_ready((prefix, suffix))

    ref_prefix, ref_suffix = psrnn_reference(x, lengths, sid, params)
    assert jnp.allclose(prefix, ref_prefix, atol=1e-4), "prefix mismatch"
    assert jnp.allclose(suffix, ref_suffix, atol=1e-4), "suffix mismatch"

    # Second case exercising the multi-tile batch grid + padding path.
    B2, T2 = 20, 8
    kx2, kl2, ks2 = jax.random.split(jax.random.PRNGKey(1), 3)
    x2 = jax.random.normal(kx2, (B2, T2, INPUT), jnp.float32)
    lengths2 = jax.random.randint(kl2, (B2,), 1, T2 + 1).astype(jnp.int32)
    sid2 = jax.random.randint(ks2, (B2,), 0, 10).astype(jnp.int32)
    p2, s2 = psrnn_forward(x2, lengths2, sid2, params)
    jax.block_until_ready((p2, s2))
    rp2, rs2 = psrnn_reference(x2, lengths2, sid2, params)
    assert jnp.allclose(p2, rp2, atol=1e-4), "prefix mismatch (multi-tile)"
    assert jnp.allclose(s2, rs2, atol=1e-4), "suffix mismatch (multi-tile)"

    print("KERNEL_OK")
</pallas_src>

<mosaic_0001>
module attributes {stable_mosaic.version = 11 : i64} {
  func.func @psrnn_kernel(%arg0: i32, %arg1: memref<8x8x128xf32, #tpu.memory_space<vmem>>, %arg2: memref<8x128xf32, #tpu.memory_space<vmem>>, %arg3: memref<8x1xi32, #tpu.memory_space<vmem>>, %arg4: memref<8x32xf32, #tpu.memory_space<vmem>>, %arg5: memref<8x32xf32, #tpu.memory_space<vmem>>, %arg6: memref<32x256xf32, #tpu.memory_space<vmem>>, %arg7: memref<64x256xf32, #tpu.memory_space<vmem>>, %arg8: memref<1x256xf32, #tpu.memory_space<vmem>>, %arg9: memref<256x128xf32, #tpu.memory_space<vmem>>, %arg10: memref<1x128xf32, #tpu.memory_space<vmem>>, %arg11: memref<128x128xf32, #tpu.memory_space<vmem>>, %arg12: memref<1x128xf32, #tpu.memory_space<vmem>>, %arg13: memref<8x128xf32, #tpu.memory_space<vmem>>) attributes {dimension_semantics = [#tpu.dimension_semantics<parallel>], iteration_bounds = array<i64: 1>, scalar_prefetch = 0 : i64, scratch_operands = 0 : i64, tpu.core_type = #tpu.core_type<tc>, window_params = [{transform_indices = @transform_0, window_bounds = array<i64: 8, 8, 128>}, {transform_indices = @transform_1, window_bounds = array<i64: 8, 128>}, {transform_indices = @transform_2, window_bounds = array<i64: 8, 1>}, {transform_indices = @transform_3, window_bounds = array<i64: 8, 32>}, {transform_indices = @transform_4, window_bounds = array<i64: 8, 32>}, {pipeline_mode = #tpu.pipeline_mode<synchronous>, transform_indices = @transform_5, window_bounds = array<i64: 32, 256>}, {pipeline_mode = #tpu.pipeline_mode<synchronous>, transform_indices = @transform_6, window_bounds = array<i64: 64, 256>}, {pipeline_mode = #tpu.pipeline_mode<synchronous>, transform_indices = @transform_7, window_bounds = array<i64: 1, 256>}, {pipeline_mode = #tpu.pipeline_mode<synchronous>, transform_indices = @transform_8, window_bounds = array<i64: 256, 128>}, {pipeline_mode = #tpu.pipeline_mode<synchronous>, transform_indices = @transform_9, window_bounds = array<i64: 1, 128>}, {pipeline_mode = #tpu.pipeline_mode<synchronous>, transform_indices = @transform_10, window_bounds = array<i64: 128, 128>}, {pipeline_mode = #tpu.pipeline_mode<synchronous>, transform_indices = @transform_11, window_bounds = array<i64: 1, 128>}, {transform_indices = @transform_12, window_bounds = array<i64: 8, 128>}]} {
    %c0 = arith.constant 0 : index
    %c0_0 = arith.constant 0 : index
    %0 = vector.load %arg3[%c0, %c0_0] : memref<8x1xi32, #tpu.memory_space<vmem>>, vector<8x1xi32>
    %c0_1 = arith.constant 0 : index
    %c0_2 = arith.constant 0 : index
    %1 = vector.load %arg4[%c0_1, %c0_2] : memref<8x32xf32, #tpu.memory_space<vmem>>, vector<8x32xf32>
    %c0_3 = arith.constant 0 : index
    %c0_4 = arith.constant 0 : index
    %2 = vector.load %arg5[%c0_3, %c0_4] : memref<8x32xf32, #tpu.memory_space<vmem>>, vector<8x32xf32>
    %c0_5 = arith.constant 0 : index
    %c0_6 = arith.constant 0 : index
    %3 = vector.load %arg6[%c0_5, %c0_6] : memref<32x256xf32, #tpu.memory_space<vmem>>, vector<32x128xf32>
    %c0_7 = arith.constant 0 : index
    %c128 = arith.constant 128 : index
    %4 = vector.load %arg6[%c0_7, %c128] : memref<32x256xf32, #tpu.memory_space<vmem>>, vector<32x128xf32>
    %c0_i32 = arith.constant 0 : i32
    %5 = arith.index_cast %c0_i32 : i32 to index
    %c0_8 = arith.constant 0 : index
    %c0_9 = arith.constant 0 : index
    %6 = vector.load %arg1[%5, %c0_8, %c0_9] : memref<8x8x128xf32, #tpu.memory_space<vmem>>, vector<1x8x128xf32>
    %7 = vector.shape_cast %6 : vector<1x8x128xf32> to vector<8x128xf32>
    %cst = arith.constant dense<0.000000e+00> : vector<8x128xf32>
    %8 = tpu.matmul %1, %3, %cst {dimension_numbers = #tpu.dot_dimension_numbers<[1], [0], [0], [1], [0, 0, 1, 1], [], []>} : vector<8x32xf32>, vector<32x128xf32>, vector<8x128xf32> -> vector<8x128xf32>
    %9 = arith.addf %7, %8 : vector<8x128xf32>
    %10 = arith.negf %9 : vector<8x128xf32>
    %11 = math.exp %10 : vector<8x128xf32>
    %cst_10 = arith.constant 1.000000e+00 : f32
    %12 = vector.broadcast %cst_10 : f32 to vector<8x128xf32>
    %13 = arith.addf %12, %11 : vector<8x128xf32>
    %14 = arith.divf %12, %13 : vector<8x128xf32>
    %15 = math.tanh %9 : vector<8x128xf32>
    %16 = vector.extract_strided_slice %14 {offsets = [0, 0], sizes = [8, 32], strides = [1, 1]} : vector<8x128xf32> to vector<8x32xf32>
    %17 = vector.extract_strided_slice %14 {offsets = [0, 32], sizes = [8, 32], strides = [1, 1]} : vector<8x128xf32> to vector<8x32xf32>
    %18 = vector.extract_strided_slice %14 {offsets = [0, 96], sizes = [8, 32], strides = [1, 1]} : vector<8x128xf32> to vector<8x32xf32>
    %19 = vector.extract_strided_slice %15 {offsets = [0, 64], sizes = [8, 32], strides = [1, 1]} : vector<8x128xf32> to vector<8x32xf32>
    %20 = arith.mulf %17, %2 : vector<8x32xf32>
    %21 = arith.mulf %16, %19 : vector<8x32xf32>
    %22 = arith.addf %20, %21 : vector<8x32xf32>
    %23 = math.tanh %22 : vector<8x32xf32>
    %24 = arith.mulf %18, %23 : vector<8x32xf32>
    %25 = vector.broadcast %c0_i32 : i32 to vector<8x1xi32>
    %26 = arith.cmpi slt, %25, %0 : vector<8x1xi32>
    %27 = vector.shape_cast %26 : vector<8x1xi1> to vector<8x1xi1>
    %28 = vector.broadcast %27 : vector<8x1xi1> to vector<8x32xi1>
    %29 = arith.select %28, %24, %1 : vector<8x32xi1>, vector<8x32xf32>
    %30 = vector.shape_cast %26 : vector<8x1xi1> to vector<8x1xi1>
    %31 = vector.broadcast %30 : vector<8x1xi1> to vector<8x32xi1>
    %32 = arith.select %31, %22, %2 : vector<8x32xi1>, vector<8x32xf32>
    %c1_i32 = arith.constant 1 : i32
    %33 = arith.index_cast %c1_i32 : i32 to index
    %c0_11 = arith.constant 0 : index
    %c0_12 = arith.constant 0 : index
    %34 = vector.load %arg1[%33, %c0_11, %c0_12] : memref<8x8x128xf32, #tpu.memory_space<vmem>>, vector<1x8x128xf32>
    %35 = vector.shape_cast %34 : vector<1x8x128xf32> to vector<8x128xf32>
    %cst_13 = arith.constant dense<0.000000e+00> : vector<8x128xf32>
    %36 = tpu.matmul %29, %3, %cst_13 {dimension_numbers = #tpu.dot_dimension_numbers<[1], [0], [0], [1], [0, 0, 1, 1], [], []>} : vector<8x32xf32>, vector<32x128xf32>, vector<8x128xf32> -> vector<8x128xf32>
    %37 = arith.addf %35, %36 : vector<8x128xf32>
    %38 = arith.negf %37 : vector<8x128xf32>
    %39 = math.exp %38 : vector<8x128xf32>
    %cst_14 = arith.constant 1.000000e+00 : f32
    %40 = vector.broadcast %cst_14 : f32 to vector<8x128xf32>
    %41 = arith.addf %40, %39 : vector<8x128xf32>
    %42 = arith.divf %40, %41 : vector<8x128xf32>
    %43 = math.tanh %37 : vector<8x128xf32>
    %44 = vector.extract_strided_slice %42 {offsets = [0, 0], sizes = [8, 32], strides = [1, 1]} : vector<8x128xf32> to vector<8x32xf32>
    %45 = vector.extract_strided_slice %42 {offsets = [0, 32], sizes = [8, 32], strides = [1, 1]} : vector<8x128xf32> to vector<8x32xf32>
    %46 = vector.extract_strided_slice %42 {offsets = [0, 96], sizes = [8, 32], strides = [1, 1]} : vector<8x128xf32> to vector<8x32xf32>
    %47 = vector.extract_strided_slice %43 {offsets = [0, 64], sizes = [8, 32], strides = [1, 1]} : vector<8x128xf32> to vector<8x32xf32>
    %48 = arith.mulf %45, %32 : vector<8x32xf32>
    %49 = arith.mulf %44, %47 : vector<8x32xf32>
    %50 = arith.addf %48, %49 : vector<8x32xf32>
    %51 = math.tanh %50 : vector<8x32xf32>
    %52 = arith.mulf %46, %51 : vector<8x32xf32>
    %53 = vector.broadcast %c1_i32 : i32 to vector<8x1xi32>
    %54 = arith.cmpi slt, %53, %0 : vector<8x1xi32>
    %55 = vector.shape_cast %54 : vector<8x1xi1> to vector<8x1xi1>
    %56 = vector.broadcast %55 : vector<8x1xi1> to vector<8x32xi1>
    %57 = arith.select %56, %52, %29 : vector<8x32xi1>, vector<8x32xf32>
    %58 = vector.shape_cast %54 : vector<8x1xi1> to vector<8x1xi1>
    %59 = vector.broadcast %58 : vector<8x1xi1> to vector<8x32xi1>
    %60 = arith.select %59, %50, %32 : vector<8x32xi1>, vector<8x32xf32>
    %c2_i32 = arith.constant 2 : i32
    %61 = arith.index_cast %c2_i32 : i32 to index
    %c0_15 = arith.constant 0 : index
    %c0_16 = arith.constant 0 : index
    %62 = vector.load %arg1[%61, %c0_15, %c0_16] : memref<8x8x128xf32, #tpu.memory_space<vmem>>, vector<1x8x128xf32>
    %63 = vector.shape_cast %62 : vector<1x8x128xf32> to vector<8x128xf32>
    %cst_17 = arith.constant dense<0.000000e+00> : vector<8x128xf32>
    %64 = tpu.matmul %57, %3, %cst_17 {dimension_numbers = #tpu.dot_dimension_numbers<[1], [0], [0], [1], [0, 0, 1, 1], [], []>} : vector<8x32xf32>, vector<32x128xf32>, vector<8x128xf32> -> vector<8x128xf32>
    %65 = arith.addf %63, %64 : vector<8x128xf32>
    %66 = arith.negf %65 : vector<8x128xf32>
    %67 = math.exp %66 : vector<8x128xf32>
    %cst_18 = arith.constant 1.000000e+00 : f32
    %68 = vector.broadcast %cst_18 : f32 to vector<8x128xf32>
    %69 = arith.addf %68, %67 : vector<8x128xf32>
    %70 = arith.divf %68, %69 : vector<8x128xf32>
    %71 = math.tanh %65 : vector<8x128xf32>
    %72 = vector.extract_strided_slice %70 {offsets = [0, 0], sizes = [8, 32], strides = [1, 1]} : vector<8x128xf32> to vector<8x32xf32>
    %73 = vector.extract_strided_slice %70 {offsets = [0, 32], sizes = [8, 32], strides = [1, 1]} : vector<8x128xf32> to vector<8x32xf32>
    %74 = vector.extract_strided_slice %70 {offsets = [0, 96], sizes = [8, 32], strides = [1, 1]} : vector<8x128xf32> to vector<8x32xf32>
    %75 = vector.extract_strided_slice %71 {offsets = [0, 64], sizes = [8, 32], strides = [1, 1]} : vector<8x128xf32> to vector<8x32xf32>
    %76 = arith.mulf %73, %60 : vector<8x32xf32>
    %77 = arith.mulf %72, %75 : vector<8x32xf32>
    %78 = arith.addf %76, %77 : vector<8x32xf32>
    %79 = math.tanh %78 : vector<8x32xf32>
    %80 = arith.mulf %74, %79 : vector<8x32xf32>
    %81 = vector.broadcast %c2_i32 : i32 to vector<8x1xi32>
    %82 = arith.cmpi slt, %81, %0 : vector<8x1xi32>
    %83 = vector.shape_cast %82 : vector<8x1xi1> to vector<8x1xi1>
    %84 = vector.broadcast %83 : vector<8x1xi1> to vector<8x32xi1>
    %85 = arith.select %84, %80, %57 : vector<8x32xi1>, vector<8x32xf32>
    %86 = vector.shape_cast %82 : vector<8x1xi1> to vector<8x1xi1>
    %87 = vector.broadcast %86 : vector<8x1xi1> to vector<8x32xi1>
    %88 = arith.select %87, %78, %60 : vector<8x32xi1>, vector<8x32xf32>
    %c3_i32 = arith.constant 3 : i32
    %89 = arith.index_cast %c3_i32 : i32 to index
    %c0_19 = arith.constant 0 : index
    %c0_20 = arith.constant 0 : index
    %90 = vector.load %arg1[%89, %c0_19, %c0_20] : memref<8x8x128xf32, #tpu.memory_space<vmem>>, vector<1x8x128xf32>
    %91 = vector.shape_cast %90 : vector<1x8x128xf32> to vector<8x128xf32>
    %cst_21 = arith.constant dense<0.000000e+00> : vector<8x128xf32>
    %92 = tpu.matmul %85, %3, %cst_21 {dimension_numbers = #tpu.dot_dimension_numbers<[1], [0], [0], [1], [0, 0, 1, 1], [], []>} : vector<8x32xf32>, vector<32x128xf32>, vector<8x128xf32> -> vector<8x128xf32>
    %93 = arith.addf %91, %92 : vector<8x128xf32>
    %94 = arith.negf %93 : vector<8x128xf32>
    %95 = math.exp %94 : vector<8x128xf32>
    %cst_22 = arith.constant 1.000000e+00 : f32
    %96 = vector.broadcast %cst_22 : f32 to vector<8x128xf32>
    %97 = arith.addf %96, %95 : vector<8x128xf32>
    %98 = arith.divf %96, %97 : vector<8x128xf32>
    %99 = math.tanh %93 : vector<8x128xf32>
    %100 = vector.extract_strided_slice %98 {offsets = [0, 0], sizes = [8, 32], strides = [1, 1]} : vector<8x128xf32> to vector<8x32xf32>
    %101 = vector.extract_strided_slice %98 {offsets = [0, 32], sizes = [8, 32], strides = [1, 1]} : vector<8x128xf32> to vector<8x32xf32>
    %102 = vector.extract_strided_slice %98 {offsets = [0, 96], sizes = [8, 32], strides = [1, 1]} : vector<8x128xf32> to vector<8x32xf32>
    %103 = vector.extract_strided_slice %99 {offsets = [0, 64], sizes = [8, 32], strides = [1, 1]} : vector<8x128xf32> to vector<8x32xf32>
    %104 = arith.mulf %101, %88 : vector<8x32xf32>
    %105 = arith.mulf %100, %103 : vector<8x32xf32>
    %106 = arith.addf %104, %105 : vector<8x32xf32>
    %107 = math.tanh %106 : vector<8x32xf32>
    %108 = arith.mulf %102, %107 : vector<8x32xf32>
    %109 = vector.broadcast %c3_i32 : i32 to vector<8x1xi32>
    %110 = arith.cmpi slt, %109, %0 : vector<8x1xi32>
    %111 = vector.shape_cast %110 : vector<8x1xi1> to vector<8x1xi1>
    %112 = vector.broadcast %111 : vector<8x1xi1> to vector<8x32xi1>
    %113 = arith.select %112, %108, %85 : vector<8x32xi1>, vector<8x32xf32>
    %114 = vector.shape_cast %110 : vector<8x1xi1> to vector<8x1xi1>
    %115 = vector.broadcast %114 : vector<8x1xi1> to vector<8x32xi1>
    %116 = arith.select %115, %106, %88 : vector<8x32xi1>, vector<8x32xf32>
    %c4_i32 = arith.constant 4 : i32
    %117 = arith.index_cast %c4_i32 : i32 to index
    %c0_23 = arith.constant 0 : index
    %c0_24 = arith.constant 0 : index
    %118 = vector.load %arg1[%117, %c0_23, %c0_24] : memref<8x8x128xf32, #tpu.memory_space<vmem>>, vector<1x8x128xf32>
    %119 = vector.shape_cast %118 : vector<1x8x128xf32> to vector<8x128xf32>
    %cst_25 = arith.constant dense<0.000000e+00> : vector<8x128xf32>
    %120 = tpu.matmul %113, %3, %cst_25 {dimension_numbers = #tpu.dot_dimension_numbers<[1], [0], [0], [1], [0, 0, 1, 1], [], []>} : vector<8x32xf32>, vector<32x128xf32>, vector<8x128xf32> -> vector<8x128xf32>
    %121 = arith.addf %119, %120 : vector<8x128xf32>
    %122 = arith.negf %121 : vector<8x128xf32>
    %123 = math.exp %122 : vector<8x128xf32>
    %cst_26 = arith.constant 1.000000e+00 : f32
    %124 = vector.broadcast %cst_26 : f32 to vector<8x128xf32>
    %125 = arith.addf %124, %123 : vector<8x128xf32>
    %126 = arith.divf %124, %125 : vector<8x128xf32>
    %127 = math.tanh %121 : vector<8x128xf32>
    %128 = vector.extract_strided_slice %126 {offsets = [0, 0], sizes = [8, 32], strides = [1, 1]} : vector<8x128xf32> to vector<8x32xf32>
    %129 = vector.extract_strided_slice %126 {offsets = [0, 32], sizes = [8, 32], strides = [1, 1]} : vector<8x128xf32> to vector<8x32xf32>
    %130 = vector.extract_strided_slice %126 {offsets = [0, 96], sizes = [8, 32], strides = [1, 1]} : vector<8x128xf32> to vector<8x32xf32>
    %131 = vector.extract_strided_slice %127 {offsets = [0, 64], sizes = [8, 32], strides = [1, 1]} : vector<8x128xf32> to vector<8x32xf32>
    %132 = arith.mulf %129, %116 : vector<8x32xf32>
    %133 = arith.mulf %128, %131 : vector<8x32xf32>
    %134 = arith.addf %132, %133 : vector<8x32xf32>
    %135 = math.tanh %134 : vector<8x32xf32>
    %136 = arith.mulf %130, %135 : vector<8x32xf32>
    %137 = vector.broadcast %c4_i32 : i32 to vector<8x1xi32>
    %138 = arith.cmpi slt, %137, %0 : vector<8x1xi32>
    %139 = vector.shape_cast %138 : vector<8x1xi1> to vector<8x1xi1>
    %140 = vector.broadcast %139 : vector<8x1xi1> to vector<8x32xi1>
    %141 = arith.select %140, %136, %113 : vector<8x32xi1>, vector<8x32xf32>
    %142 = vector.shape_cast %138 : vector<8x1xi1> to vector<8x1xi1>
    %143 = vector.broadcast %142 : vector<8x1xi1> to vector<8x32xi1>
    %144 = arith.select %143, %134, %116 : vector<8x32xi1>, vector<8x32xf32>
    %c5_i32 = arith.constant 5 : i32
    %145 = arith.index_cast %c5_i32 : i32 to index
    %c0_27 = arith.constant 0 : index
    %c0_28 = arith.constant 0 : index
    %146 = vector.load %arg1[%145, %c0_27, %c0_28] : memref<8x8x128xf32, #tpu.memory_space<vmem>>, vector<1x8x128xf32>
    %147 = vector.shape_cast %146 : vector<1x8x128xf32> to vector<8x128xf32>
    %cst_29 = arith.constant dense<0.000000e+00> : vector<8x128xf32>
    %148 = tpu.matmul %141, %3, %cst_29 {dimension_numbers = #tpu.dot_dimension_numbers<[1], [0], [0], [1], [0, 0, 1, 1], [], []>} : vector<8x32xf32>, vector<32x128xf32>, vector<8x128xf32> -> vector<8x128xf32>
    %149 = arith.addf %147, %148 : vector<8x128xf32>
    %150 = arith.negf %149 : vector<8x128xf32>
    %151 = math.exp %150 : vector<8x128xf32>
    %cst_30 = arith.constant 1.000000e+00 : f32
    %152 = vector.broadcast %cst_30 : f32 to vector<8x128xf32>
    %153 = arith.addf %152, %151 : vector<8x128xf32>
    %154 = arith.divf %152, %153 : vector<8x128xf32>
    %155 = math.tanh %149 : vector<8x128xf32>
    %156 = vector.extract_strided_slice %154 {offsets = [0, 0], sizes = [8, 32], strides = [1, 1]} : vector<8x128xf32> to vector<8x32xf32>
    %157 = vector.extract_strided_slice %154 {offsets = [0, 32], sizes = [8, 32], strides = [1, 1]} : vector<8x128xf32> to vector<8x32xf32>
    %158 = vector.extract_strided_slice %154 {offsets = [0, 96], sizes = [8, 32], strides = [1, 1]} : vector<8x128xf32> to vector<8x32xf32>
    %159 = vector.extract_strided_slice %155 {offsets = [0, 64], sizes = [8, 32], strides = [1, 1]} : vector<8x128xf32> to vector<8x32xf32>
    %160 = arith.mulf %157, %144 : vector<8x32xf32>
    %161 = arith.mulf %156, %159 : vector<8x32xf32>
    %162 = arith.addf %160, %161 : vector<8x32xf32>
    %163 = math.tanh %162 : vector<8x32xf32>
    %164 = arith.mulf %158, %163 : vector<8x32xf32>
    %165 = vector.broadcast %c5_i32 : i32 to vector<8x1xi32>
    %166 = arith.cmpi slt, %165, %0 : vector<8x1xi32>
    %167 = vector.shape_cast %166 : vector<8x1xi1> to vector<8x1xi1>
    %168 = vector.broadcast %167 : vector<8x1xi1> to vector<8x32xi1>
    %169 = arith.select %168, %164, %141 : vector<8x32xi1>, vector<8x32xf32>
    %170 = vector.shape_cast %166 : vector<8x1xi1> to vector<8x1xi1>
    %171 = vector.broadcast %170 : vector<8x1xi1> to vector<8x32xi1>
    %172 = arith.select %171, %162, %144 : vector<8x32xi1>, vector<8x32xf32>
    %c6_i32 = arith.constant 6 : i32
    %173 = arith.index_cast %c6_i32 : i32 to index
    %c0_31 = arith.constant 0 : index
    %c0_32 = arith.constant 0 : index
    %174 = vector.load %arg1[%173, %c0_31, %c0_32] : memref<8x8x128xf32, #tpu.memory_space<vmem>>, vector<1x8x128xf32>
    %175 = vector.shape_cast %174 : vector<1x8x128xf32> to vector<8x128xf32>
    %cst_33 = arith.constant dense<0.000000e+00> : vector<8x128xf32>
    %176 = tpu.matmul %169, %3, %cst_33 {dimension_numbers = #tpu.dot_dimension_numbers<[1], [0], [0], [1], [0, 0, 1, 1], [], []>} : vector<8x32xf32>, vector<32x128xf32>, vector<8x128xf32> -> vector<8x128xf32>
    %177 = arith.addf %175, %176 : vector<8x128xf32>
    %178 = arith.negf %177 : vector<8x128xf32>
    %179 = math.exp %178 : vector<8x128xf32>
    %cst_34 = arith.constant 1.000000e+00 : f32
    %180 = vector.broadcast %cst_34 : f32 to vector<8x128xf32>
    %181 = arith.addf %180, %179 : vector<8x128xf32>
    %182 = arith.divf %180, %181 : vector<8x128xf32>
    %183 = math.tanh %177 : vector<8x128xf32>
    %184 = vector.extract_strided_slice %182 {offsets = [0, 0], sizes = [8, 32], strides = [1, 1]} : vector<8x128xf32> to vector<8x32xf32>
    %185 = vector.extract_strided_slice %182 {offsets = [0, 32], sizes = [8, 32], strides = [1, 1]} : vector<8x128xf32> to vector<8x32xf32>
    %186 = vector.extract_strided_slice %182 {offsets = [0, 96], sizes = [8, 32], strides = [1, 1]} : vector<8x128xf32> to vector<8x32xf32>
    %187 = vector.extract_strided_slice %183 {offsets = [0, 64], sizes = [8, 32], strides = [1, 1]} : vector<8x128xf32> to vector<8x32xf32>
    %188 = arith.mulf %185, %172 : vector<8x32xf32>
    %189 = arith.mulf %184, %187 : vector<8x32xf32>
    %190 = arith.addf %188, %189 : vector<8x32xf32>
    %191 = math.tanh %190 : vector<8x32xf32>
    %192 = arith.mulf %186, %191 : vector<8x32xf32>
    %193 = vector.broadcast %c6_i32 : i32 to vector<8x1xi32>
    %194 = arith.cmpi slt, %193, %0 : vector<8x1xi32>
    %195 = vector.shape_cast %194 : vector<8x1xi1> to vector<8x1xi1>
    %196 = vector.broadcast %195 : vector<8x1xi1> to vector<8x32xi1>
    %197 = arith.select %196, %192, %169 : vector<8x32xi1>, vector<8x32xf32>
    %198 = vector.shape_cast %194 : vector<8x1xi1> to vector<8x1xi1>
    %199 = vector.broadcast %198 : vector<8x1xi1> to vector<8x32xi1>
    %200 = arith.select %199, %190, %172 : vector<8x32xi1>, vector<8x32xf32>
    %c7_i32 = arith.constant 7 : i32
    %201 = arith.index_cast %c7_i32 : i32 to index
    %c0_35 = arith.constant 0 : index
    %c0_36 = arith.constant 0 : index
    %202 = vector.load %arg1[%201, %c0_35, %c0_36] : memref<8x8x128xf32, #tpu.memory_space<vmem>>, vector<1x8x128xf32>
    %203 = vector.shape_cast %202 : vector<1x8x128xf32> to vector<8x128xf32>
    %cst_37 = arith.constant dense<0.000000e+00> : vector<8x128xf32>
    %204 = tpu.matmul %197, %3, %cst_37 {dimension_numbers = #tpu.dot_dimension_numbers<[1], [0], [0], [1], [0, 0, 1, 1], [], []>} : vector<8x32xf32>, vector<32x128xf32>, vector<8x128xf32> -> vector<8x128xf32>
    %205 = arith.addf %203, %204 : vector<8x128xf32>
    %206 = arith.negf %205 : vector<8x128xf32>
    %207 = math.exp %206 : vector<8x128xf32>
    %cst_38 = arith.constant 1.000000e+00 : f32
    %208 = vector.broadcast %cst_38 : f32 to vector<8x128xf32>
    %209 = arith.addf %208, %207 : vector<8x128xf32>
    %210 = arith.divf %208, %209 : vector<8x128xf32>
    %211 = math.tanh %205 : vector<8x128xf32>
    %212 = vector.extract_strided_slice %210 {offsets = [0, 0], sizes = [8, 32], strides = [1, 1]} : vector<8x128xf32> to vector<8x32xf32>
    %213 = vector.extract_strided_slice %210 {offsets = [0, 32], sizes = [8, 32], strides = [1, 1]} : vector<8x128xf32> to vector<8x32xf32>
    %214 = vector.extract_strided_slice %210 {offsets = [0, 96], sizes = [8, 32], strides = [1, 1]} : vector<8x128xf32> to vector<8x32xf32>
    %215 = vector.extract_strided_slice %211 {offsets = [0, 64], sizes = [8, 32], strides = [1, 1]} : vector<8x128xf32> to vector<8x32xf32>
    %216 = arith.mulf %213, %200 : vector<8x32xf32>
    %217 = arith.mulf %212, %215 : vector<8x32xf32>
    %218 = arith.addf %216, %217 : vector<8x32xf32>
    %219 = math.tanh %218 : vector<8x32xf32>
    %220 = arith.mulf %214, %219 : vector<8x32xf32>
    %221 = vector.broadcast %c7_i32 : i32 to vector<8x1xi32>
    %222 = arith.cmpi slt, %221, %0 : vector<8x1xi32>
    %223 = vector.shape_cast %222 : vector<8x1xi1> to vector<8x1xi1>
    %224 = vector.broadcast %223 : vector<8x1xi1> to vector<8x32xi1>
    %225 = arith.select %224, %220, %197 : vector<8x32xi1>, vector<8x32xf32>
    %226 = vector.shape_cast %222 : vector<8x1xi1> to vector<8x1xi1>
    %227 = vector.broadcast %226 : vector<8x1xi1> to vector<8x32xi1>
    %228 = arith.select %227, %218, %200 : vector<8x32xi1>, vector<8x32xf32>
    %c8_i32 = arith.constant 8 : i32
    %c0_39 = arith.constant 0 : index
    %c0_40 = arith.constant 0 : index
    %229 = vector.load %arg2[%c0_39, %c0_40] : memref<8x128xf32, #tpu.memory_space<vmem>>, vector<8x128xf32>
    %cst_41 = arith.constant dense<0.000000e+00> : vector<8x128xf32>
    %230 = tpu.matmul %1, %4, %cst_41 {dimension_numbers = #tpu.dot_dimension_numbers<[1], [0], [0], [1], [0, 0, 1, 1], [], []>} : vector<8x32xf32>, vector<32x128xf32>, vector<8x128xf32> -> vector<8x128xf32>
    %231 = arith.addf %229, %230 : vector<8x128xf32>
    %232 = arith.negf %231 : vector<8x128xf32>
    %233 = math.exp %232 : vector<8x128xf32>
    %cst_42 = arith.constant 1.000000e+00 : f32
    %234 = vector.broadcast %cst_42 : f32 to vector<8x128xf32>
    %235 = arith.addf %234, %233 : vector<8x128xf32>
    %236 = arith.divf %234, %235 : vector<8x128xf32>
    %237 = math.tanh %231 : vector<8x128xf32>
    %238 = vector.extract_strided_slice %236 {offsets = [0, 0], sizes = [8, 32], strides = [1, 1]} : vector<8x128xf32> to vector<8x32xf32>
    %239 = vector.extract_strided_slice %236 {offsets = [0, 32], sizes = [8, 32], strides = [1, 1]} : vector<8x128xf32> to vector<8x32xf32>
    %240 = vector.extract_strided_slice %236 {offsets = [0, 96], sizes = [8, 32], strides = [1, 1]} : vector<8x128xf32> to vector<8x32xf32>
    %241 = vector.extract_strided_slice %237 {offsets = [0, 64], sizes = [8, 32], strides = [1, 1]} : vector<8x128xf32> to vector<8x32xf32>
    %242 = arith.mulf %239, %2 : vector<8x32xf32>
    %243 = arith.mulf %238, %241 : vector<8x32xf32>
    %244 = arith.addf %242, %243 : vector<8x32xf32>
    %245 = math.tanh %244 : vector<8x32xf32>
    %246 = arith.mulf %240, %245 : vector<8x32xf32>
    %c0_43 = arith.constant 0 : index
    %c0_44 = arith.constant 0 : index
    %247 = vector.load %arg7[%c0_43, %c0_44] : memref<64x256xf32, #tpu.memory_space<vmem>>, vector<32x256xf32>
    %cst_45 = arith.constant dense<0.000000e+00> : vector<8x256xf32>
    %248 = tpu.matmul %225, %247, %cst_45 {dimension_numbers = #tpu.dot_dimension_numbers<[1], [0], [0], [1], [0, 0, 1, 1], [], []>} : vector<8x32xf32>, vector<32x256xf32>, vector<8x256xf32> -> vector<8x256xf32>
    %c32 = arith.constant 32 : index
    %c0_46 = arith.constant 0 : index
    %249 = vector.load %arg7[%c32, %c0_46] : memref<64x256xf32, #tpu.memory_space<vmem>>, vector<32x256xf32>
    %cst_47 = arith.constant dense<0.000000e+00> : vector<8x256xf32>
    %250 = tpu.matmul %246, %249, %cst_47 {dimension_numbers = #tpu.dot_dimension_numbers<[1], [0], [0], [1], [0, 0, 1, 1], [], []>} : vector<8x32xf32>, vector<32x256xf32>, vector<8x256xf32> -> vector<8x256xf32>
    %251 = arith.addf %248, %250 : vector<8x256xf32>
    %c0_48 = arith.constant 0 : index
    %c0_49 = arith.constant 0 : index
    %252 = vector.load %arg8[%c0_48, %c0_49] : memref<1x256xf32, #tpu.memory_space<vmem>>, vector<1x256xf32>
    %253 = vector.broadcast %252 : vector<1x256xf32> to vector<8x256xf32>
    %254 = arith.addf %251, %253 : vector<8x256xf32>
    %cst_50 = arith.constant 0.000000e+00 : f32
    %255 = vector.broadcast %cst_50 : f32 to vector<8x256xf32>
    %256 = arith.maximumf %254, %255 : vector<8x256xf32>
    %c0_51 = arith.constant 0 : index
    %c0_52 = arith.constant 0 : index
    %257 = vector.load %arg9[%c0_51, %c0_52] : memref<256x128xf32, #tpu.memory_space<vmem>>, vector<256x128xf32>
    %cst_53 = arith.constant dense<0.000000e+00> : vector<8x128xf32>
    %258 = tpu.matmul %256, %257, %cst_53 {dimension_numbers = #tpu.dot_dimension_numbers<[1], [0], [0], [1], [0, 0, 1, 1], [], []>} : vector<8x256xf32>, vector<256x128xf32>, vector<8x128xf32> -> vector<8x128xf32>
    %c0_54 = arith.constant 0 : index
    %c0_55 = arith.constant 0 : index
    %259 = vector.load %arg10[%c0_54, %c0_55] : memref<1x128xf32, #tpu.memory_space<vmem>>, vector<1x128xf32>
    %260 = vector.broadcast %259 : vector<1x128xf32> to vector<8x128xf32>
    %261 = arith.addf %258, %260 : vector<8x128xf32>
    %cst_56 = arith.constant 0.000000e+00 : f32
    %262 = vector.broadcast %cst_56 : f32 to vector<8x128xf32>
    %263 = arith.maximumf %261, %262 : vector<8x128xf32>
    %c0_57 = arith.constant 0 : index
    %c0_58 = arith.constant 0 : index
    %264 = vector.load %arg11[%c0_57, %c0_58] : memref<128x128xf32, #tpu.memory_space<vmem>>, vector<128x128xf32>
    %cst_59 = arith.constant dense<0.000000e+00> : vector<8x128xf32>
    %265 = tpu.matmul %263, %264, %cst_59 {dimension_numbers = #tpu.dot_dimension_numbers<[1], [0], [0], [1], [0, 0, 1, 1], [], []>} : vector<8x128xf32>, vector<128x128xf32>, vector<8x128xf32> -> vector<8x128xf32>
    %c0_60 = arith.constant 0 : index
    %c0_61 = arith.constant 0 : index
    %266 = vector.load %arg12[%c0_60, %c0_61] : memref<1x128xf32, #tpu.memory_space<vmem>>, vector<1x128xf32>
    %267 = vector.broadcast %266 : vector<1x128xf32> to vector<8x128xf32>
    %268 = arith.addf %265, %267 : vector<8x128xf32>
    %269 = arith.negf %268 : vector<8x128xf32>
    %270 = math.exp %269 : vector<8x128xf32>
    %cst_62 = arith.constant 1.000000e+00 : f32
    %271 = vector.broadcast %cst_62 : f32 to vector<8x128xf32>
    %272 = arith.addf %271, %270 : vector<8x128xf32>
    %273 = arith.divf %271, %272 : vector<8x128xf32>
    %c0_63 = arith.constant 0 : index
    %c0_64 = arith.constant 0 : index
    %274 = vector.load %arg13[%c0_63, %c0_64] : memref<8x128xf32, #tpu.memory_space<vmem>>, vector<8x128xf32>
    tpu.vector_store %arg13[%c0_63, %c0_64], %273 {strides = array<i32>} : memref<8x128xf32, #tpu.memory_space<vmem>>, vector<8x128xf32>,
    return
  }
  func.func @transform_0(%arg0: i32) -> (i32, i32, i32) {
    %c0_i32 = arith.constant 0 : i32
    %c0_i32_0 = arith.constant 0 : i32
    %c0_i32_1 = arith.constant 0 : i32
    return %c0_i32, %arg0, %c0_i32_0 : i32, i32, i32
  }
  func.func @transform_1(%arg0: i32) -> (i32, i32) {
    %c0_i32 = arith.constant 0 : i32
    %c0_i32_0 = arith.constant 0 : i32
    return %arg0, %c0_i32 : i32, i32
  }
  func.func @transform_2(%arg0: i32) -> (i32, i32) {
    %c0_i32 = arith.constant 0 : i32
    %c0_i32_0 = arith.constant 0 : i32
    return %arg0, %c0_i32 : i32, i32
  }
  func.func @transform_3(%arg0: i32) -> (i32, i32) {
    %c0_i32 = arith.constant 0 : i32
    %c0_i32_0 = arith.constant 0 : i32
    return %arg0, %c0_i32 : i32, i32
  }
  func.func @transform_4(%arg0: i32) -> (i32, i32) {
    %c0_i32 = arith.constant 0 : i32
    %c0_i32_0 = arith.constant 0 : i32
    return %arg0, %c0_i32 : i32, i32
  }
  func.func @transform_5(%arg0: i32) -> (i32, i32) {
    %c0_i32 = arith.constant 0 : i32
    %c0_i32_0 = arith.constant 0 : i32
    %c0_i32_1 = arith.constant 0 : i32
    return %c0_i32, %c0_i32_0 : i32, i32
  }
  func.func @transform_6(%arg0: i32) -> (i32, i32) {
    %c0_i32 = arith.constant 0 : i32
    %c0_i32_0 = arith.constant 0 : i32
    %c0_i32_1 = arith.constant 0 : i32
    return %c0_i32, %c0_i32_0 : i32, i32
  }
  func.func @transform_7(%arg0: i32) -> (i32, i32) {
    %c0_i32 = arith.constant 0 : i32
    %c0_i32_0 = arith.constant 0 : i32
    %c0_i32_1 = arith.constant 0 : i32
    return %c0_i32, %c0_i32_0 : i32, i32
  }
  func.func @transform_8(%arg0: i32) -> (i32, i32) {
    %c0_i32 = arith.constant 0 : i32
    %c0_i32_0 = arith.constant 0 : i32
    %c0_i32_1 = arith.constant 0 : i32
    return %c0_i32, %c0_i32_0 : i32, i32
  }
  func.func @transform_9(%arg0: i32) -> (i32, i32) {
    %c0_i32 = arith.constant 0 : i32
    %c0_i32_0 = arith.constant 0 : i32
    %c0_i32_1 = arith.constant 0 : i32
    return %c0_i32, %c0_i32_0 : i32, i32
  }
  func.func @transform_10(%arg0: i32) -> (i32, i32) {
    %c0_i32 = arith.constant 0 : i32
    %c0_i32_0 = arith.constant 0 : i32
    %c0_i32_1 = arith.constant 0 : i32
    return %c0_i32, %c0_i32_0 : i32, i32
  }
  func.func @transform_11(%arg0: i32) -> (i32, i32) {
    %c0_i32 = arith.constant 0 : i32
    %c0_i32_0 = arith.constant 0 : i32
    %c0_i32_1 = arith.constant 0 : i32
    return %c0_i32, %c0_i32_0 : i32, i32
  }
  func.func @transform_12(%arg0: i32) -> (i32, i32) {
    %c0_i32 = arith.constant 0 : i32
    %c0_i32_0 = arith.constant 0 : i32
    return %arg0, %c0_i32 : i32, i32
  }
}

</mosaic_0001>

<llo_original>
// kernel: psrnn_forward.1
$region0: #{psrnn_forward.1}
  #allocation0 [shape = 'u32[]', space=smem, size = 0x4, offset = 0x4, fixed_abs, tag = 'smem constant byte address 0x4 - core index']
  #allocation1 [shape = 'u32[144,128]{1,0:T(1,128)}', space=vmem, size = 0x12000, scoped, tag = 'internal scratch']
  %s0 = inlined_call_operand.vmem [shape: f32[8,8,128], index: 0, kind: input, shape index: {}]
  %s1 = inlined_call_operand.vmem [shape: f32[8,128], index: 1, kind: input, shape index: {}]
  %s2 = inlined_call_operand.vmem [shape: s32[8,1], index: 2, kind: input, shape index: {}]
  %s3 = inlined_call_operand.vmem [shape: f32[8,32], index: 3, kind: input, shape index: {}]
  %s4 = inlined_call_operand.vmem [shape: f32[8,32], index: 4, kind: input, shape index: {}]
  %s5 = inlined_call_operand.vmem [shape: f32[32,256], index: 5, kind: input, shape index: {}]
  %s6 = inlined_call_operand.vmem [shape: f32[64,256], index: 6, kind: input, shape index: {}]
  %s7 = inlined_call_operand.vmem [shape: f32[1,256], index: 7, kind: input, shape index: {}]
  %s8 = inlined_call_operand.vmem [shape: f32[256,128], index: 8, kind: input, shape index: {}]
  %s9 = inlined_call_operand.vmem [shape: f32[1,128], index: 9, kind: input, shape index: {}]
  %s10 = inlined_call_operand.vmem [shape: f32[128,128], index: 10, kind: input, shape index: {}]
  %s11 = inlined_call_operand.vmem [shape: f32[1,128], index: 11, kind: input, shape index: {}]
  %s12 = inlined_call_operand.vmem [shape: f32[8,128], index: 12, kind: output, shape index: {}]
  %s13 = sld [smem:[#allocation0]]
  $region58: #{psrnn_forward.1} parent=0
    _
  %s15 = ssub.s32 1, %s13
  %s16 = scalar_select 0, %s15, %s13
  // Predicated region
  $region2: #{psrnn_forward.1} parent=0 // pred_check
    _
  $region3: #{psrnn_forward.1} parent=0 // pred_check_branch
    %18 = sbr.rel (0) target = $region5
  $region4: #{psrnn_forward.1} parent=0 // pred_region
    _
  $region5: #{psrnn_forward.1} parent=0 // pred_fallthru
    _
  // Predicated region
  $region6: #{psrnn_forward.1} parent=0 // pred_check
    _
  $region7: #{psrnn_forward.1} parent=0 // pred_check_branch
    %20 = sbr.rel (0) target = $region9
  $region8: #{psrnn_forward.1} parent=0 // pred_region
    _
  $region9: #{psrnn_forward.1} parent=0 // pred_fallthru
    _
  // Predicated region
  $region10: #{psrnn_forward.1} parent=0 // pred_check
    _
  $region11: #{psrnn_forward.1} parent=0 // pred_check_branch
    %22 = sbr.rel (0) target = $region13
  $region12: #{psrnn_forward.1} parent=0 // pred_region
    _
  $region13: #{psrnn_forward.1} parent=0 // pred_fallthru
    _
  // Predicated region
  $region14: #{psrnn_forward.1} parent=0 // pred_check
    _
  $region15: #{psrnn_forward.1} parent=0 // pred_check_branch
    %24 = sbr.rel (0) target = $region17
  $region16: #{psrnn_forward.1} parent=0 // pred_region
    _
  $region17: #{psrnn_forward.1} parent=0 // pred_fallthru
    _
  // Predicated region
  $region18: #{psrnn_forward.1} parent=0 // pred_check
    _
  $region19: #{psrnn_forward.1} parent=0 // pred_check_branch
    %26 = sbr.rel (0) target = $region21
  $region20: #{psrnn_forward.1} parent=0 // pred_region
    _
  $region21: #{psrnn_forward.1} parent=0 // pred_fallthru
    _
  // Predicated region
  $region22: #{psrnn_forward.1} parent=0 // pred_check
    _
  $region23: #{psrnn_forward.1} parent=0 // pred_check_branch
    %28 = sbr.rel (0) target = $region25
  $region24: #{psrnn_forward.1} parent=0 // pred_region
    _
  $region25: #{psrnn_forward.1} parent=0 // pred_fallthru
    _
  // Predicated region
  $region26: #{psrnn_forward.1} parent=0 // pred_check
    _
  $region27: #{psrnn_forward.1} parent=0 // pred_check_branch
    %30 = sbr.rel (0) target = $region29
  $region28: #{psrnn_forward.1} parent=0 // pred_region
    _
  $region29: #{psrnn_forward.1} parent=0 // pred_fallthru
    _
  // Predicated region
  $region30: #{psrnn_forward.1} parent=0 // pred_check
    _
  $region31: #{psrnn_forward.1} parent=0 // pred_check_branch
    %32 = sbr.rel (0) target = $region33
  $region32: #{psrnn_forward.1} parent=0 // pred_region
    _
  $region33: #{psrnn_forward.1} parent=0 // pred_fallthru
    _
  // Predicated region
  $region34: #{psrnn_forward.1} parent=0 // pred_check
    _
  $region35: #{psrnn_forward.1} parent=0 // pred_check_branch
    %34 = sbr.rel (0) target = $region37
  $region36: #{psrnn_forward.1} parent=0 // pred_region
    _
  $region37: #{psrnn_forward.1} parent=0 // pred_fallthru
    _
  // Predicated region
  $region38: #{psrnn_forward.1} parent=0 // pred_check
    _
  $region39: #{psrnn_forward.1} parent=0 // pred_check_branch
    %36 = sbr.rel (0) target = $region41
  $region40: #{psrnn_forward.1} parent=0 // pred_region
    _
  $region41: #{psrnn_forward.1} parent=0 // pred_fallthru
    _
  // Predicated region
  $region42: #{psrnn_forward.1} parent=0 // pred_check
    _
  $region43: #{psrnn_forward.1} parent=0 // pred_check_branch
    %38 = sbr.rel (0) target = $region45
  $region44: #{psrnn_forward.1} parent=0 // pred_region
    _
  $region45: #{psrnn_forward.1} parent=0 // pred_fallthru
    _
  // Predicated region
  $region46: #{psrnn_forward.1} parent=0 // pred_check
    _
  $region47: #{psrnn_forward.1} parent=0 // pred_check_branch
    %40 = sbr.rel (0) target = $region49
  $region48: #{psrnn_forward.1} parent=0 // pred_region
    _
  $region49: #{psrnn_forward.1} parent=0 // pred_fallthru
    _
  %v41 = vld [vmem:[%s2] sm:$0xff]
  %v42 = vld [vmem:[%s3] sm:$0xff]
  %v43 = vld [vmem:[%s4] sm:$0xff]
  %v44 = vld [vmem:[%s5] sm:$0xff]
  %v45 = vld [vmem:[%s5 + $0x10] sm:$0xff]
  %v46 = vld [vmem:[%s5 + $0x20] sm:$0xff]
  %v47 = vld [vmem:[%s5 + $0x30] sm:$0xff]
  %v48 = vld [vmem:[%s5 + $0x8] sm:$0xff]
  %v49 = vld [vmem:[%s5 + $0x18] sm:$0xff]
  %v50 = vld [vmem:[%s5 + $0x28] sm:$0xff]
  %v51 = vld [vmem:[%s5 + $0x38] sm:$0xff]
  %v52 = vld [vmem:[%s0] sm:$0xff]
  %vm53 = vcmask 261120
  %v55 = vsel %vm53, %v42, 0
  %57 = vmatprep.subr.mxu0 0.0
  %58 = vmatpush1.msra.mxu0 %v44
  %59 = vmatprep.subr.mxu0 0.0
  %60 = vmatpush1.msra.mxu0 %v45
  %61 = vmatprep.subr.mxu0 0.0
  %62 = vmatpush1.msra.mxu0 %v46
  %63 = vmatprep.subr.mxu0 0.0
  %64 = vmatpush1.msra.mxu0 %v47
  %65 = vmatprep.subr.mxu0 0.0
  %66 = vmatpush1.msra.mxu0 0.0
  %67 = vmatprep.subr.mxu0 0.0
  %68 = vmatpush1.msra.mxu0 0.0
  %69 = vmatprep.subr.mxu0 0.0
  %70 = vmatpush1.msra.mxu0 0.0
  %71 = vmatprep.subr.mxu0 0.0
  %72 = vmatpush1.msra.mxu0 0.0
  %73 = vmatprep.subr.mxu0 0.0
  %74 = vmatpush1.msra.mxu0 0.0
  %75 = vmatprep.subr.mxu0 0.0
  %76 = vmatpush1.msra.mxu0 0.0
  %77 = vmatprep.subr.mxu0 0.0
  %78 = vmatpush1.msra.mxu0 0.0
  %79 = vmatprep.subr.mxu0 0.0
  %80 = vmatpush1.msra.mxu0 0.0
  %81 = vmatprep.subr.mxu0 0.0
  %82 = vmatpush1.msra.mxu0 0.0
  %83 = vmatprep.subr.mxu0 0.0
  %84 = vmatpush1.msra.mxu0 0.0
  %85 = vmatprep.subr.mxu0 0.0
  %86 = vmatpush1.msra.mxu0 0.0
  %87 = vmatprep.subr.mxu0 0.0
  %88 = vmatpush1.msra.mxu0 0.0
  %89 = vmatprep.subr.mxu0 0.0
  %90 = vmatpush1.msra.mxu0 0.0
  %91 = vmatprep.subr.mxu0 0.0
  %92 = vmatpush1.msra.mxu0 0.0
  %93 = vmatprep.subr.mxu0 0.0
  %94 = vmatpush1.msra.mxu0 0.0
  %95 = vmatprep.subr.mxu0 0.0
  %96 = vmatpush1.msra.mxu0 0.0
  %97 = vmatprep.subr.mxu0 0.0
  %98 = vmatpush1.msra.mxu0 0.0
  %99 = vmatprep.subr.mxu0 0.0
  %100 = vmatpush1.msra.mxu0 0.0
  %101 = vmatprep.subr.mxu0 0.0
  %102 = vmatpush1.msra.mxu0 0.0
  %103 = vmatprep.subr.mxu0 0.0
  %104 = vmatpush1.msra.mxu0 0.0
  %105 = vmatprep.subr.mxu0 0.0
  %106 = vmatpush1.msra.mxu0 0.0
  %107 = vmatprep.subr.mxu0 0.0
  %108 = vmatpush1.msra.mxu0 0.0
  %109 = vmatprep.subr.mxu0 0.0
  %110 = vmatpush1.msra.mxu0 0.0
  %111 = vmatprep.subr.mxu0 0.0
  %112 = vmatpush1.msra.mxu0 0.0
  %113 = vmatprep.subr.mxu0 0.0
  %114 = vmatpush1.msra.mxu0 0.0
  %115 = vmatprep.subr.mxu0 0.0
  %116 = vmatpush1.msra.mxu0 0.0
  %117 = vmatprep.subr.mxu0 0.0
  %118 = vmatpush1.msra.mxu0 0.0
  %119 = vmatprep.subr.mxu0 0.0
  %120 = vmatpush1.msra.mxu0 0.0
  %121 = vmatprep.mubr.f32.mxu0 0.0
  %122 = vmatmul.mubr.f32.gmra.mrb[0].mxu0 %v55
  %v123 = vpop.f32.mrb[0].mxu0
  %v124 = vadd.f32 0.0, %v123
  %v125 = vpop.f32.mrb[0].mxu0
  %126 = vdwg.mxu0
  %v127 = vadd.f32 %v52, %v124
  %v128 = vxor.u32 %v127, 2147483648
  %v129 = vmul.f32 %v128, 1.442695
  %v130 = vpow.pop %v129
  %v131 = vadd.f32 %v130, 1.0
  %v132 = vrcp.pop %v131
  %v133 = vmul.f32 1.0, %v132
  %v134 = vtanh.pop %v127
  %136 = vrot.lane.b32.xlu0 %v43, 32
  %v137 = vpop.permute.xlu0 %136
  %v139 = vmul.f32 %v133, %v137
  %141 = vrot.lane.b32.xlu0 %v134, 64
  %v142 = vpop.permute.xlu0 %141
  %v144 = vmul.f32 %v133, %v142
  %146 = vrot.lane.b32.xlu0 %v144, 32
  %v147 = vpop.permute.xlu0 %146
  %v149 = vadd.f32 %v139, %v147
  %v150 = vtanh.pop %v149
  %152 = vrot.lane.b32.xlu0 %v150, 64
  %v153 = vpop.permute.xlu0 %152
  %v155 = vmul.f32 %v133, %v153
  %vm156 = vcmp.gt.s32.totalorder %v41, 0
  %v157 = vsel %vm156, 1, 0
  %158 = vset.pattern.permute.xlu0 0
  %159 = vperm.xlu0 %158, %v157
  %v160 = vpop.permute.xlu0 %159
  %vm161 = vcmp.eq.s32.totalorder %v160, 1
  %162 = vrot.lane.b32.xlu0 %v42, 96
  %v163 = vpop.permute.xlu0 %162
  %v165 = vsel %vm161, %v155, %v163
  %v166 = vsel %vm161, %v149, %v137
  %s167 = scalar_lea.vmem %s0, 8
  %v168 = vld [vmem:[%s167] sm:$0xff]
  %170 = vrot.lane.b32.xlu0 %v165, 32
  %v171 = vpop.permute.xlu0 %170
  %v172 = vsel %vm53, %v171, 0
  %174 = vmatprep.subr.mxu0 0.0
  %175 = vmatpush1.msra.mxu0 %v44
  %176 = vmatprep.subr.mxu0 0.0
  %177 = vmatpush1.msra.mxu0 %v45
  %178 = vmatprep.subr.mxu0 0.0
  %179 = vmatpush1.msra.mxu0 %v46
  %180 = vmatprep.subr.mxu0 0.0
  %181 = vmatpush1.msra.mxu0 %v47
  %182 = vmatprep.subr.mxu0 0.0
  %183 = vmatpush1.msra.mxu0 0.0
  %184 = vmatprep.subr.mxu0 0.0
  %185 = vmatpush1.msra.mxu0 0.0
  %186 = vmatprep.subr.mxu0 0.0
  %187 = vmatpush1.msra.mxu0 0.0
  %188 = vmatprep.subr.mxu0 0.0
  %189 = vmatpush1.msra.mxu0 0.0
  %190 = vmatprep.subr.mxu0 0.0
  %191 = vmatpush1.msra.mxu0 0.0
  %192 = vmatprep.subr.mxu0 0.0
  %193 = vmatpush1.msra.mxu0 0.0
  %194 = vmatprep.subr.mxu0 0.0
  %195 = vmatpush1.msra.mxu0 0.0
  %196 = vmatprep.subr.mxu0 0.0
  %197 = vmatpush1.msra.mxu0 0.0
  %198 = vmatprep.subr.mxu0 0.0
  %199 = vmatpush1.msra.mxu0 0.0
  %200 = vmatprep.subr.mxu0 0.0
  %201 = vmatpush1.msra.mxu0 0.0
  %202 = vmatprep.subr.mxu0 0.0
  %203 = vmatpush1.msra.mxu0 0.0
  %204 = vmatprep.subr.mxu0 0.0
  %205 = vmatpush1.msra.mxu0 0.0
  %206 = vmatprep.subr.mxu0 0.0
  %207 = vmatpush1.msra.mxu0 0.0
  %208 = vmatprep.subr.mxu0 0.0
  %209 = vmatpush1.msra.mxu0 0.0
  %210 = vmatprep.subr.mxu0 0.0
  %211 = vmatpush1.msra.mxu0 0.0
  %212 = vmatprep.subr.mxu0 0.0
  %213 = vmatpush1.msra.mxu0 0.0
  %214 = vmatprep.subr.mxu0 0.0
  %215 = vmatpush1.msra.mxu0 0.0
  %216 = vmatprep.subr.mxu0 0.0
  %217 = vmatpush1.msra.mxu0 0.0
  %218 = vmatprep.subr.mxu0 0.0
  %219 = vmatpush1.msra.mxu0 0.0
  %220 = vmatprep.subr.mxu0 0.0
  %221 = vmatpush1.msra.mxu0 0.0
  %222 = vmatprep.subr.mxu0 0.0
  %223 = vmatpush1.msra.mxu0 0.0
  %224 = vmatprep.subr.mxu0 0.0
  %225 = vmatpush1.msra.mxu0 0.0
  %226 = vmatprep.subr.mxu0 0.0
  %227 = vmatpush1.msra.mxu0 0.0
  %228 = vmatprep.subr.mxu0 0.0
  %229 = vmatpush1.msra.mxu0 0.0
  %230 = vmatprep.subr.mxu0 0.0
  %231 = vmatpush1.msra.mxu0 0.0
  %232 = vmatprep.subr.mxu0 0.0
  %233 = vmatpush1.msra.mxu0 0.0
  %234 = vmatprep.subr.mxu0 0.0
  %235 = vmatpush1.msra.mxu0 0.0
  %236 = vmatprep.subr.mxu0 0.0
  %237 = vmatpush1.msra.mxu0 0.0
  %238 = vmatprep.mubr.f32.mxu0 0.0
  %239 = vmatmul.mubr.f32.gmra.mrb[0].mxu0 %v172
  %v240 = vpop.f32.mrb[0].mxu0
  %v241 = vadd.f32 0.0, %v240
  %v242 = vpop.f32.mrb[0].mxu0
  %243 = vdwg.mxu0
  %v244 = vadd.f32 %v168, %v241
  %v245 = vxor.u32 %v244, 2147483648
  %v246 = vmul.f32 %v245, 1.442695
  %v247 = vpow.pop %v246
  %v248 = vadd.f32 %v247, 1.0
  %v249 = vrcp.pop %v248
  %v250 = vmul.f32 1.0, %v249
  %v251 = vtanh.pop %v244
  %v252 = vmul.f32 %v250, %v166
  %254 = vrot.lane.b32.xlu0 %v251, 64
  %v255 = vpop.permute.xlu0 %254
  %v257 = vmul.f32 %v250, %v255
  %259 = vrot.lane.b32.xlu0 %v257, 32
  %v260 = vpop.permute.xlu0 %259
  %v262 = vadd.f32 %v252, %v260
  %v263 = vtanh.pop %v262
  %265 = vrot.lane.b32.xlu0 %v263, 64
  %v266 = vpop.permute.xlu0 %265
  %v268 = vmul.f32 %v250, %v266
  %vm269 = vcmp.gt.s32.totalorder %v41, 1
  %v270 = vsel %vm269, 1, 0
  %271 = vset.pattern.permute.xlu0 0
  %272 = vperm.xlu0 %271, %v270
  %v273 = vpop.permute.xlu0 %272
  %vm274 = vcmp.eq.s32.totalorder %v273, 1
  %v275 = vsel %vm274, %v268, %v165
  %v276 = vsel %vm274, %v262, %v166
  %s277 = scalar_lea.vmem %s0, 16
  %v278 = vld [vmem:[%s277] sm:$0xff]
  %280 = vrot.lane.b32.xlu0 %v275, 32
  %v281 = vpop.permute.xlu0 %280
  %v282 = vsel %vm53, %v281, 0
  %284 = vmatprep.subr.mxu0 0.0
  %285 = vmatpush1.msra.mxu0 %v44
  %286 = vmatprep.subr.mxu0 0.0
  %287 = vmatpush1.msra.mxu0 %v45
  %288 = vmatprep.subr.mxu0 0.0
  %289 = vmatpush1.msra.mxu0 %v46
  %290 = vmatprep.subr.mxu0 0.0
  %291 = vmatpush1.msra.mxu0 %v47
  %292 = vmatprep.subr.mxu0 0.0
  %293 = vmatpush1.msra.mxu0 0.0
  %294 = vmatprep.subr.mxu0 0.0
  %295 = vmatpush1.msra.mxu0 0.0
  %296 = vmatprep.subr.mxu0 0.0
  %297 = vmatpush1.msra.mxu0 0.0
  %298 = vmatprep.subr.mxu0 0.0
  %299 = vmatpush1.msra.mxu0 0.0
  %300 = vmatprep.subr.mxu0 0.0
  %301 = vmatpush1.msra.mxu0 0.0
  %302 = vmatprep.subr.mxu0 0.0
  %303 = vmatpush1.msra.mxu0 0.0
  %304 = vmatprep.subr.mxu0 0.0
  %305 = vmatpush1.msra.mxu0 0.0
  %306 = vmatprep.subr.mxu0 0.0
  %307 = vmatpush1.msra.mxu0 0.0
  %308 = vmatprep.subr.mxu0 0.0
  %309 = vmatpush1.msra.mxu0 0.0
  %310 = vmatprep.subr.mxu0 0.0
  %311 = vmatpush1.msra.mxu0 0.0
  %312 = vmatprep.subr.mxu0 0.0
  %313 = vmatpush1.msra.mxu0 0.0
  %314 = vmatprep.subr.mxu0 0.0
  %315 = vmatpush1.msra.mxu0 0.0
  %316 = vmatprep.subr.mxu0 0.0
  %317 = vmatpush1.msra.mxu0 0.0
  %318 = vmatprep.subr.mxu0 0.0
  %319 = vmatpush1.msra.mxu0 0.0
  %320 = vmatprep.subr.mxu0 0.0
  %321 = vmatpush1.msra.mxu0 0.0
  %322 = vmatprep.subr.mxu0 0.0
  %323 = vmatpush1.msra.mxu0 0.0
  %324 = vmatprep.subr.mxu0 0.0
  %325 = vmatpush1.msra.mxu0 0.0
  %326 = vmatprep.subr.mxu0 0.0
  %327 = vmatpush1.msra.mxu0 0.0
  %328 = vmatprep.subr.mxu0 0.0
  %329 = vmatpush1.msra.mxu0 0.0
  %330 = vmatprep.subr.mxu0 0.0
  %331 = vmatpush1.msra.mxu0 0.0
  %332 = vmatprep.subr.mxu0 0.0
  %333 = vmatpush1.msra.mxu0 0.0
  %334 = vmatprep.subr.mxu0 0.0
  %335 = vmatpush1.msra.mxu0 0.0
  %336 = vmatprep.subr.mxu0 0.0
  %337 = vmatpush1.msra.mxu0 0.0
  %338 = vmatprep.subr.mxu0 0.0
  %339 = vmatpush1.msra.mxu0 0.0
  %340 = vmatprep.subr.mxu0 0.0
  %341 = vmatpush1.msra.mxu0 0.0
  %342 = vmatprep.subr.mxu0 0.0
  %343 = vmatpush1.msra.mxu0 0.0
  %344 = vmatprep.subr.mxu0 0.0
  %345 = vmatpush1.msra.mxu0 0.0
  %346 = vmatprep.subr.mxu0 0.0
  %347 = vmatpush1.msra.mxu0 0.0
  %348 = vmatprep.mubr.f32.mxu0 0.0
  %349 = vmatmul.mubr.f32.gmra.mrb[0].mxu0 %v282
  %v350 = vpop.f32.mrb[0].mxu0
  %v351 = vadd.f32 0.0, %v350
  %v352 = vpop.f32.mrb[0].mxu0
  %353 = vdwg.mxu0
  %v354 = vadd.f32 %v278, %v351
  %v355 = vxor.u32 %v354, 2147483648
  %v356 = vmul.f32 %v355, 1.442695
  %v357 = vpow.pop %v356
  %v358 = vadd.f32 %v357, 1.0
  %v359 = vrcp.pop %v358
  %v360 = vmul.f32 1.0, %v359
  %v361 = vtanh.pop %v354
  %v362 = vmul.f32 %v360, %v276
  %364 = vrot.lane.b32.xlu0 %v361, 64
  %v365 = vpop.permute.xlu0 %364
  %v367 = vmul.f32 %v360, %v365
  %369 = vrot.lane.b32.xlu0 %v367, 32
  %v370 = vpop.permute.xlu0 %369
  %v372 = vadd.f32 %v362, %v370
  %v373 = vtanh.pop %v372
  %375 = vrot.lane.b32.xlu0 %v373, 64
  %v376 = vpop.permute.xlu0 %375
  %v378 = vmul.f32 %v360, %v376
  %vm379 = vcmp.gt.s32.totalorder %v41, 2
  %v380 = vsel %vm379, 1, 0
  %381 = vset.pattern.permute.xlu0 0
  %382 = vperm.xlu0 %381, %v380
  %v383 = vpop.permute.xlu0 %382
  %vm384 = vcmp.eq.s32.totalorder %v383, 1
  %v385 = vsel %vm384, %v378, %v275
  %v386 = vsel %vm384, %v372, %v276
  %s387 = scalar_lea.vmem %s0, 24
  %v388 = vld [vmem:[%s387] sm:$0xff]
  %390 = vrot.lane.b32.xlu0 %v385, 32
  %v391 = vpop.permute.xlu0 %390
  %v392 = vsel %vm53, %v391, 0
  %394 = vmatprep.subr.mxu0 0.0
  %395 = vmatpush1.msra.mxu0 %v44
  %396 = vmatprep.subr.mxu0 0.0
  %397 = vmatpush1.msra.mxu0 %v45
  %398 = vmatprep.subr.mxu0 0.0
  %399 = vmatpush1.msra.mxu0 %v46
  %400 = vmatprep.subr.mxu0 0.0
  %401 = vmatpush1.msra.mxu0 %v47
  %402 = vmatprep.subr.mxu0 0.0
  %403 = vmatpush1.msra.mxu0 0.0
  %404 = vmatprep.subr.mxu0 0.0
  %405 = vmatpush1.msra.mxu0 0.0
  %406 = vmatprep.subr.mxu0 0.0
  %407 = vmatpush1.msra.mxu0 0.0
  %408 = vmatprep.subr.mxu0 0.0
  %409 = vmatpush1.msra.mxu0 0.0
  %410 = vmatprep.subr.mxu0 0.0
  %411 = vmatpush1.msra.mxu0 0.0
  %412 = vmatprep.subr.mxu0 0.0
  %413 = vmatpush1.msra.mxu0 0.0
  %414 = vmatprep.subr.mxu0 0.0
  %415 = vmatpush1.msra.mxu0 0.0
  %416 = vmatprep.subr.mxu0 0.0
  %417 = vmatpush1.msra.mxu0 0.0
  %418 = vmatprep.subr.mxu0 0.0
  %419 = vmatpush1.msra.mxu0 0.0
  %420 = vmatprep.subr.mxu0 0.0
  %421 = vmatpush1.msra.mxu0 0.0
  %422 = vmatprep.subr.mxu0 0.0
  %423 = vmatpush1.msra.mxu0 0.0
  %424 = vmatprep.subr.mxu0 0.0
  %425 = vmatpush1.msra.mxu0 0.0
  %426 = vmatprep.subr.mxu0 0.0
  %427 = vmatpush1.msra.mxu0 0.0
  %428 = vmatprep.subr.mxu0 0.0
  %429 = vmatpush1.msra.mxu0 0.0
  %430 = vmatprep.subr.mxu0 0.0
  %431 = vmatpush1.msra.mxu0 0.0
  %432 = vmatprep.subr.mxu0 0.0
  %433 = vmatpush1.msra.mxu0 0.0
  %434 = vmatprep.subr.mxu0 0.0
  %435 = vmatpush1.msra.mxu0 0.0
  %436 = vmatprep.subr.mxu0 0.0
  %437 = vmatpush1.msra.mxu0 0.0
  %438 = vmatprep.subr.mxu0 0.0
  %439 = vmatpush1.msra.mxu0 0.0
  %440 = vmatprep.subr.mxu0 0.0
  %441 = vmatpush1.msra.mxu0 0.0
  %442 = vmatprep.subr.mxu0 0.0
  %443 = vmatpush1.msra.mxu0 0.0
  %444 = vmatprep.subr.mxu0 0.0
  %445 = vmatpush1.msra.mxu0 0.0
  %446 = vmatprep.subr.mxu0 0.0
  %447 = vmatpush1.msra.mxu0 0.0
  %448 = vmatprep.subr.mxu0 0.0
  %449 = vmatpush1.msra.mxu0 0.0
  %450 = vmatprep.subr.mxu0 0.0
  %451 = vmatpush1.msra.mxu0 0.0
  %452 = vmatprep.subr.mxu0 0.0
  %453 = vmatpush1.msra.mxu0 0.0
  %454 = vmatprep.subr.mxu0 0.0
  %455 = vmatpush1.msra.mxu0 0.0
  %456 = vmatprep.subr.mxu0 0.0
  %457 = vmatpush1.msra.mxu0 0.0
  %458 = vmatprep.mubr.f32.mxu0 0.0
  %459 = vmatmul.mubr.f32.gmra.mrb[0].mxu0 %v392
  %v460 = vpop.f32.mrb[0].mxu0
  %v461 = vadd.f32 0.0, %v460
  %v462 = vpop.f32.mrb[0].mxu0
  %463 = vdwg.mxu0
  %v464 = vadd.f32 %v388, %v461
  %v465 = vxor.u32 %v464, 2147483648
  %v466 = vmul.f32 %v465, 1.442695
  %v467 = vpow.pop %v466
  %v468 = vadd.f32 %v467, 1.0
  %v469 = vrcp.pop %v468
  %v470 = vmul.f32 1.0, %v469
  %v471 = vtanh.pop %v464
  %v472 = vmul.f32 %v470, %v386
  %474 = vrot.lane.b32.xlu0 %v471, 64
  %v475 = vpop.permute.xlu0 %474
  %v477 = vmul.f32 %v470, %v475
  %479 = vrot.lane.b32.xlu0 %v477, 32
  %v480 = vpop.permute.xlu0 %479
  %v482 = vadd.f32 %v472, %v480
  %v483 = vtanh.pop %v482
  %485 = vrot.lane.b32.xlu0 %v483, 64
  %v486 = vpop.permute.xlu0 %485
  %v488 = vmul.f32 %v470, %v486
  %vm489 = vcmp.gt.s32.totalorder %v41, 3
  %v490 = vsel %vm489, 1, 0
  %491 = vset.pattern.permute.xlu0 0
  %492 = vperm.xlu0 %491, %v490
  %v493 = vpop.permute.xlu0 %492
  %vm494 = vcmp.eq.s32.totalorder %v493, 1
  %v495 = vsel %vm494, %v488, %v385
  %v496 = vsel %vm494, %v482, %v386
  %s497 = scalar_lea.vmem %s0, 32
  %v498 = vld [vmem:[%s497] sm:$0xff]
  %500 = vrot.lane.b32.xlu0 %v495, 32
  %v501 = vpop.permute.xlu0 %500
  %v502 = vsel %vm53, %v501, 0
  %504 = vmatprep.subr.mxu0 0.0
  %505 = vmatpush1.msra.mxu0 %v44
  %506 = vmatprep.subr.mxu0 0.0
  %507 = vmatpush1.msra.mxu0 %v45
  %508 = vmatprep.subr.mxu0 0.0
  %509 = vmatpush1.msra.mxu0 %v46
  %510 = vmatprep.subr.mxu0 0.0
  %511 = vmatpush1.msra.mxu0 %v47
  %512 = vmatprep.subr.mxu0 0.0
  %513 = vmatpush1.msra.mxu0 0.0
  %514 = vmatprep.subr.mxu0 0.0
  %515 = vmatpush1.msra.mxu0 0.0
  %516 = vmatprep.subr.mxu0 0.0
  %517 = vmatpush1.msra.mxu0 0.0
  %518 = vmatprep.subr.mxu0 0.0
  %519 = vmatpush1.msra.mxu0 0.0
  %520 = vmatprep.subr.mxu0 0.0
  %521 = vmatpush1.msra.mxu0 0.0
  %522 = vmatprep.subr.mxu0 0.0
  %523 = vmatpush1.msra.mxu0 0.0
  %524 = vmatprep.subr.mxu0 0.0
  %525 = vmatpush1.msra.mxu0 0.0
  %526 = vmatprep.subr.mxu0 0.0
  %527 = vmatpush1.msra.mxu0 0.0
  %528 = vmatprep.subr.mxu0 0.0
  %529 = vmatpush1.msra.mxu0 0.0
  %530 = vmatprep.subr.mxu0 0.0
  %531 = vmatpush1.msra.mxu0 0.0
  %532 = vmatprep.subr.mxu0 0.0
  %533 = vmatpush1.msra.mxu0 0.0
  %534 = vmatprep.subr.mxu0 0.0
  %535 = vmatpush1.msra.mxu0 0.0
  %536 = vmatprep.subr.mxu0 0.0
  %537 = vmatpush1.msra.mxu0 0.0
  %538 = vmatprep.subr.mxu0 0.0
  %539 = vmatpush1.msra.mxu0 0.0
  %540 = vmatprep.subr.mxu0 0.0
  %541 = vmatpush1.msra.mxu0 0.0
  %542 = vmatprep.subr.mxu0 0.0
  %543 = vmatpush1.msra.mxu0 0.0
  %544 = vmatprep.subr.mxu0 0.0
  %545 = vmatpush1.msra.mxu0 0.0
  %546 = vmatprep.subr.mxu0 0.0
  %547 = vmatpush1.msra.mxu0 0.0
  %548 = vmatprep.subr.mxu0 0.0
  %549 = vmatpush1.msra.mxu0 0.0
  %550 = vmatprep.subr.mxu0 0.0
  %551 = vmatpush1.msra.mxu0 0.0
  %552 = vmatprep.subr.mxu0 0.0
  %553 = vmatpush1.msra.mxu0 0.0
  %554 = vmatprep.subr.mxu0 0.0
  %555 = vmatpush1.msra.mxu0 0.0
  %556 = vmatprep.subr.mxu0 0.0
  %557 = vmatpush1.msra.mxu0 0.0
  %558 = vmatprep.subr.mxu0 0.0
  %559 = vmatpush1.msra.mxu0 0.0
  %560 = vmatprep.subr.mxu0 0.0
  %561 = vmatpush1.msra.mxu0 0.0
  %562 = vmatprep.subr.mxu0 0.0
  %563 = vmatpush1.msra.mxu0 0.0
  %564 = vmatprep.subr.mxu0 0.0
  %565 = vmatpush1.msra.mxu0 0.0
  %566 = vmatprep.subr.mxu0 0.0
  %567 = vmatpush1.msra.mxu0 0.0
  %568 = vmatprep.mubr.f32.mxu0 0.0
  %569 = vmatmul.mubr.f32.gmra.mrb[0].mxu0 %v502
  %v570 = vpop.f32.mrb[0].mxu0
  %v571 = vadd.f32 0.0, %v570
  %v572 = vpop.f32.mrb[0].mxu0
  %573 = vdwg.mxu0
  %v574 = vadd.f32 %v498, %v571
  %v575 = vxor.u32 %v574, 2147483648
  %v576 = vmul.f32 %v575, 1.442695
  %v577 = vpow.pop %v576
  %v578 = vadd.f32 %v577, 1.0
  %v579 = vrcp.pop %v578
  %v580 = vmul.f32 1.0, %v579
  %v581 = vtanh.pop %v574
  %v582 = vmul.f32 %v580, %v496
  %584 = vrot.lane.b32.xlu0 %v581, 64
  %v585 = vpop.permute.xlu0 %584
  %v587 = vmul.f32 %v580, %v585
  %589 = vrot.lane.b32.xlu0 %v587, 32
  %v590 = vpop.permute.xlu0 %589
  %v592 = vadd.f32 %v582, %v590
  %v593 = vtanh.pop %v592
  %595 = vrot.lane.b32.xlu0 %v593, 64
  %v596 = vpop.permute.xlu0 %595
  %v598 = vmul.f32 %v580, %v596
  %vm599 = vcmp.gt.s32.totalorder %v41, 4
  %v600 = vsel %vm599, 1, 0
  %601 = vset.pattern.permute.xlu0 0
  %602 = vperm.xlu0 %601, %v600
  %v603 = vpop.permute.xlu0 %602
  %vm604 = vcmp.eq.s32.totalorder %v603, 1
  %v605 = vsel %vm604, %v598, %v495
  %v606 = vsel %vm604, %v592, %v496
  %s607 = scalar_lea.vmem %s0, 40
  %v608 = vld [vmem:[%s607] sm:$0xff]
  %610 = vrot.lane.b32.xlu0 %v605, 32
  %v611 = vpop.permute.xlu0 %610
  %v612 = vsel %vm53, %v611, 0
  %614 = vmatprep.subr.mxu0 0.0
  %615 = vmatpush1.msra.mxu0 %v44
  %616 = vmatprep.subr.mxu0 0.0
  %617 = vmatpush1.msra.mxu0 %v45
  %618 = vmatprep.subr.mxu0 0.0
  %619 = vmatpush1.msra.mxu0 %v46
  %620 = vmatprep.subr.mxu0 0.0
  %621 = vmatpush1.msra.mxu0 %v47
  %622 = vmatprep.subr.mxu0 0.0
  %623 = vmatpush1.msra.mxu0 0.0
  %624 = vmatprep.subr.mxu0 0.0
  %625 = vmatpush1.msra.mxu0 0.0
  %626 = vmatprep.subr.mxu0 0.0
  %627 = vmatpush1.msra.mxu0 0.0
  %628 = vmatprep.subr.mxu0 0.0
  %629 = vmatpush1.msra.mxu0 0.0
  %630 = vmatprep.subr.mxu0 0.0
  %631 = vmatpush1.msra.mxu0 0.0
  %632 = vmatprep.subr.mxu0 0.0
  %633 = vmatpush1.msra.mxu0 0.0
  %634 = vmatprep.subr.mxu0 0.0
  %635 = vmatpush1.msra.mxu0 0.0
  %636 = vmatprep.subr.mxu0 0.0
  %637 = vmatpush1.msra.mxu0 0.0
  %638 = vmatprep.subr.mxu0 0.0
  %639 = vmatpush1.msra.mxu0 0.0
  %640 = vmatprep.subr.mxu0 0.0
  %641 = vmatpush1.msra.mxu0 0.0
  %642 = vmatprep.subr.mxu0 0.0
  %643 = vmatpush1.msra.mxu0 0.0
  %644 = vmatprep.subr.mxu0 0.0
  %645 = vmatpush1.msra.mxu0 0.0
  %646 = vmatprep.subr.mxu0 0.0
  %647 = vmatpush1.msra.mxu0 0.0
  %648 = vmatprep.subr.mxu0 0.0
  %649 = vmatpush1.msra.mxu0 0.0
  %650 = vmatprep.subr.mxu0 0.0
  %651 = vmatpush1.msra.mxu0 0.0
  %652 = vmatprep.subr.mxu0 0.0
  %653 = vmatpush1.msra.mxu0 0.0
  %654 = vmatprep.subr.mxu0 0.0
  %655 = vmatpush1.msra.mxu0 0.0
  %656 = vmatprep.subr.mxu0 0.0
  %657 = vmatpush1.msra.mxu0 0.0
  %658 = vmatprep.subr.mxu0 0.0
  %659 = vmatpush1.msra.mxu0 0.0
  %660 = vmatprep.subr.mxu0 0.0
  %661 = vmatpush1.msra.mxu0 0.0
  %662 = vmatprep.subr.mxu0 0.0
  %663 = vmatpush1.msra.mxu0 0.0
  %664 = vmatprep.subr.mxu0 0.0
  %665 = vmatpush1.msra.mxu0 0.0
  %666 = vmatprep.subr.mxu0 0.0
  %667 = vmatpush1.msra.mxu0 0.0
  %668 = vmatprep.subr.mxu0 0.0
  %669 = vmatpush1.msra.mxu0 0.0
  %670 = vmatprep.subr.mxu0 0.0
  %671 = vmatpush1.msra.mxu0 0.0
  %672 = vmatprep.subr.mxu0 0.0
  %673 = vmatpush1.msra.mxu0 0.0
  %674 = vmatprep.subr.mxu0 0.0
  %675 = vmatpush1.msra.mxu0 0.0
  %676 = vmatprep.subr.mxu0 0.0
  %677 = vmatpush1.msra.mxu0 0.0
  %678 = vmatprep.mubr.f32.mxu0 0.0
  %679 = vmatmul.mubr.f32.gmra.mrb[0].mxu0 %v612
  %v680 = vpop.f32.mrb[0].mxu0
  %v681 = vadd.f32 0.0, %v680
  %v682 = vpop.f32.mrb[0].mxu0
  %683 = vdwg.mxu0
  %v684 = vadd.f32 %v608, %v681
  %v685 = vxor.u32 %v684, 2147483648
  %v686 = vmul.f32 %v685, 1.442695
  %v687 = vpow.pop %v686
  %v688 = vadd.f32 %v687, 1.0
  %v689 = vrcp.pop %v688
  %v690 = vmul.f32 1.0, %v689
  %v691 = vtanh.pop %v684
  %v692 = vmul.f32 %v690, %v606
  %694 = vrot.lane.b32.xlu0 %v691, 64
  %v695 = vpop.permute.xlu0 %694
  %v697 = vmul.f32 %v690, %v695
  %699 = vrot.lane.b32.xlu0 %v697, 32
  %v700 = vpop.permute.xlu0 %699
  %v702 = vadd.f32 %v692, %v700
  %v703 = vtanh.pop %v702
  %705 = vrot.lane.b32.xlu0 %v703, 64
  %v706 = vpop.permute.xlu0 %705
  %v708 = vmul.f32 %v690, %v706
  %vm709 = vcmp.gt.s32.totalorder %v41, 5
  %v710 = vsel %vm709, 1, 0
  %711 = vset.pattern.permute.xlu0 0
  %712 = vperm.xlu0 %711, %v710
  %v713 = vpop.permute.xlu0 %712
  %vm714 = vcmp.eq.s32.totalorder %v713, 1
  %v715 = vsel %vm714, %v708, %v605
  %v716 = vsel %vm714, %v702, %v606
  %s717 = scalar_lea.vmem %s0, 48
  %v718 = vld [vmem:[%s717] sm:$0xff]
  %720 = vrot.lane.b32.xlu0 %v715, 32
  %v721 = vpop.permute.xlu0 %720
  %v722 = vsel %vm53, %v721, 0
  %724 = vmatprep.subr.mxu0 0.0
  %725 = vmatpush1.msra.mxu0 %v44
  %726 = vmatprep.subr.mxu0 0.0
  %727 = vmatpush1.msra.mxu0 %v45
  %728 = vmatprep.subr.mxu0 0.0
  %729 = vmatpush1.msra.mxu0 %v46
  %730 = vmatprep.subr.mxu0 0.0
  %731 = vmatpush1.msra.mxu0 %v47
  %732 = vmatprep.subr.mxu0 0.0
  %733 = vmatpush1.msra.mxu0 0.0
  %734 = vmatprep.subr.mxu0 0.0
  %735 = vmatpush1.msra.mxu0 0.0
  %736 = vmatprep.subr.mxu0 0.0
  %737 = vmatpush1.msra.mxu0 0.0
  %738 = vmatprep.subr.mxu0 0.0
  %739 = vmatpush1.msra.mxu0 0.0
  %740 = vmatprep.subr.mxu0 0.0
  %741 = vmatpush1.msra.mxu0 0.0
  %742 = vmatprep.subr.mxu0 0.0
  %743 = vmatpush1.msra.mxu0 0.0
  %744 = vmatprep.subr.mxu0 0.0
  %745 = vmatpush1.msra.mxu0 0.0
  %746 = vmatprep.subr.mxu0 0.0
  %747 = vmatpush1.msra.mxu0 0.0
  %748 = vmatprep.subr.mxu0 0.0
  %749 = vmatpush1.msra.mxu0 0.0
  %750 = vmatprep.subr.mxu0 0.0
  %751 = vmatpush1.msra.mxu0 0.0
  %752 = vmatprep.subr.mxu0 0.0
  %753 = vmatpush1.msra.mxu0 0.0
  %754 = vmatprep.subr.mxu0 0.0
  %755 = vmatpush1.msra.mxu0 0.0
  %756 = vmatprep.subr.mxu0 0.0
  %757 = vmatpush1.msra.mxu0 0.0
  %758 = vmatprep.subr.mxu0 0.0
  %759 = vmatpush1.msra.mxu0 0.0
  %760 = vmatprep.subr.mxu0 0.0
  %761 = vmatpush1.msra.mxu0 0.0
  %762 = vmatprep.subr.mxu0 0.0
  %763 = vmatpush1.msra.mxu0 0.0
  %764 = vmatprep.subr.mxu0 0.0
  %765 = vmatpush1.msra.mxu0 0.0
  %766 = vmatprep.subr.mxu0 0.0
  %767 = vmatpush1.msra.mxu0 0.0
  %768 = vmatprep.subr.mxu0 0.0
  %769 = vmatpush1.msra.mxu0 0.0
  %770 = vmatprep.subr.mxu0 0.0
  %771 = vmatpush1.msra.mxu0 0.0
  %772 = vmatprep.subr.mxu0 0.0
  %773 = vmatpush1.msra.mxu0 0.0
  %774 = vmatprep.subr.mxu0 0.0
  %775 = vmatpush1.msra.mxu0 0.0
  %776 = vmatprep.subr.mxu0 0.0
  %777 = vmatpush1.msra.mxu0 0.0
  %778 = vmatprep.subr.mxu0 0.0
  %779 = vmatpush1.msra.mxu0 0.0
  %780 = vmatprep.subr.mxu0 0.0
  %781 = vmatpush1.msra.mxu0 0.0
  %782 = vmatprep.subr.mxu0 0.0
  %783 = vmatpush1.msra.mxu0 0.0
  %784 = vmatprep.subr.mxu0 0.0
  %785 = vmatpush1.msra.mxu0 0.0
  %786 = vmatprep.subr.mxu0 0.0
  %787 = vmatpush1.msra.mxu0 0.0
  %788 = vmatprep.mubr.f32.mxu0 0.0
  %789 = vmatmul.mubr.f32.gmra.mrb[0].mxu0 %v722
  %v790 = vpop.f32.mrb[0].mxu0
  %v791 = vadd.f32 0.0, %v790
  %v792 = vpop.f32.mrb[0].mxu0
  %793 = vdwg.mxu0
  %v794 = vadd.f32 %v718, %v791
  %v795 = vxor.u32 %v794, 2147483648
  %v796 = vmul.f32 %v795, 1.442695
  %v797 = vpow.pop %v796
  %v798 = vadd.f32 %v797, 1.0
  %v799 = vrcp.pop %v798
  %v800 = vmul.f32 1.0, %v799
  %v801 = vtanh.pop %v794
  %v802 = vmul.f32 %v800, %v716
  %804 = vrot.lane.b32.xlu0 %v801, 64
  %v805 = vpop.permute.xlu0 %804
  %v807 = vmul.f32 %v800, %v805
  %809 = vrot.lane.b32.xlu0 %v807, 32
  %v810 = vpop.permute.xlu0 %809
  %v812 = vadd.f32 %v802, %v810
  %v813 = vtanh.pop %v812
  %815 = vrot.lane.b32.xlu0 %v813, 64
  %v816 = vpop.permute.xlu0 %815
  %v818 = vmul.f32 %v800, %v816
  %vm819 = vcmp.gt.s32.totalorder %v41, 6
  %v820 = vsel %vm819, 1, 0
  %821 = vset.pattern.permute.xlu0 0
  %822 = vperm.xlu0 %821, %v820
  %v823 = vpop.permute.xlu0 %822
  %vm824 = vcmp.eq.s32.totalorder %v823, 1
  %v825 = vsel %vm824, %v818, %v715
  %v826 = vsel %vm824, %v812, %v716
  %s827 = scalar_lea.vmem %s0, 56
  %v828 = vld [vmem:[%s827] sm:$0xff]
  %830 = vrot.lane.b32.xlu0 %v825, 32
  %v831 = vpop.permute.xlu0 %830
  %v832 = vsel %vm53, %v831, 0
  %834 = vmatprep.subr.mxu0 0.0
  %835 = vmatpush1.msra.mxu0 %v44
  %836 = vmatprep.subr.mxu0 0.0
  %837 = vmatpush1.msra.mxu0 %v45
  %838 = vmatprep.subr.mxu0 0.0
  %839 = vmatpush1.msra.mxu0 %v46
  %840 = vmatprep.subr.mxu0 0.0
  %841 = vmatpush1.msra.mxu0 %v47
  %842 = vmatprep.subr.mxu0 0.0
  %843 = vmatpush1.msra.mxu0 0.0
  %844 = vmatprep.subr.mxu0 0.0
  %845 = vmatpush1.msra.mxu0 0.0
  %846 = vmatprep.subr.mxu0 0.0
  %847 = vmatpush1.msra.mxu0 0.0
  %848 = vmatprep.subr.mxu0 0.0
  %849 = vmatpush1.msra.mxu0 0.0
  %850 = vmatprep.subr.mxu0 0.0
  %851 = vmatpush1.msra.mxu0 0.0
  %852 = vmatprep.subr.mxu0 0.0
  %853 = vmatpush1.msra.mxu0 0.0
  %854 = vmatprep.subr.mxu0 0.0
  %855 = vmatpush1.msra.mxu0 0.0
  %856 = vmatprep.subr.mxu0 0.0
  %857 = vmatpush1.msra.mxu0 0.0
  %858 = vmatprep.subr.mxu0 0.0
  %859 = vmatpush1.msra.mxu0 0.0
  %860 = vmatprep.subr.mxu0 0.0
  %861 = vmatpush1.msra.mxu0 0.0
  %862 = vmatprep.subr.mxu0 0.0
  %863 = vmatpush1.msra.mxu0 0.0
  %864 = vmatprep.subr.mxu0 0.0
  %865 = vmatpush1.msra.mxu0 0.0
  %866 = vmatprep.subr.mxu0 0.0
  %867 = vmatpush1.msra.mxu0 0.0
  %868 = vmatprep.subr.mxu0 0.0
  %869 = vmatpush1.msra.mxu0 0.0
  %870 = vmatprep.subr.mxu0 0.0
  %871 = vmatpush1.msra.mxu0 0.0
  %872 = vmatprep.subr.mxu0 0.0
  %873 = vmatpush1.msra.mxu0 0.0
  %874 = vmatprep.subr.mxu0 0.0
  %875 = vmatpush1.msra.mxu0 0.0
  %876 = vmatprep.subr.mxu0 0.0
  %877 = vmatpush1.msra.mxu0 0.0
  %878 = vmatprep.subr.mxu0 0.0
  %879 = vmatpush1.msra.mxu0 0.0
  %880 = vmatprep.subr.mxu0 0.0
  %881 = vmatpush1.msra.mxu0 0.0
  %882 = vmatprep.subr.mxu0 0.0
  %883 = vmatpush1.msra.mxu0 0.0
  %884 = vmatprep.subr.mxu0 0.0
  %885 = vmatpush1.msra.mxu0 0.0
  %886 = vmatprep.subr.mxu0 0.0
  %887 = vmatpush1.msra.mxu0 0.0
  %888 = vmatprep.subr.mxu0 0.0
  %889 = vmatpush1.msra.mxu0 0.0
  %890 = vmatprep.subr.mxu0 0.0
  %891 = vmatpush1.msra.mxu0 0.0
  %892 = vmatprep.subr.mxu0 0.0
  %893 = vmatpush1.msra.mxu0 0.0
  %894 = vmatprep.subr.mxu0 0.0
  %895 = vmatpush1.msra.mxu0 0.0
  %896 = vmatprep.subr.mxu0 0.0
  %897 = vmatpush1.msra.mxu0 0.0
  %898 = vmatprep.mubr.f32.mxu0 0.0
  %899 = vmatmul.mubr.f32.gmra.mrb[0].mxu0 %v832
  %v900 = vpop.f32.mrb[0].mxu0
  %v901 = vadd.f32 0.0, %v900
  %v902 = vpop.f32.mrb[0].mxu0
  %903 = vdwg.mxu0
  %v904 = vadd.f32 %v828, %v901
  %v905 = vxor.u32 %v904, 2147483648
  %v906 = vmul.f32 %v905, 1.442695
  %v907 = vpow.pop %v906
  %v908 = vadd.f32 %v907, 1.0
  %v909 = vrcp.pop %v908
  %v910 = vmul.f32 1.0, %v909
  %v911 = vtanh.pop %v904
  %v912 = vmul.f32 %v910, %v826
  %914 = vrot.lane.b32.xlu0 %v911, 64
  %v915 = vpop.permute.xlu0 %914
  %v917 = vmul.f32 %v910, %v915
  %919 = vrot.lane.b32.xlu0 %v917, 32
  %v920 = vpop.permute.xlu0 %919
  %v922 = vadd.f32 %v912, %v920
  %v923 = vtanh.pop %v922
  %925 = vrot.lane.b32.xlu0 %v923, 64
  %v926 = vpop.permute.xlu0 %925
  %v928 = vmul.f32 %v910, %v926
  %vm929 = vcmp.gt.s32.totalorder %v41, 7
  %v930 = vsel %vm929, 1, 0
  %931 = vset.pattern.permute.xlu0 0
  %932 = vperm.xlu0 %931, %v930
  %v933 = vpop.permute.xlu0 %932
  %vm934 = vcmp.eq.s32.totalorder %v933, 1
  %v935 = vsel %vm934, %v928, %v825
  %v936 = vld [vmem:[%s1] sm:$0xff]
  %937 = vmatprep.subr.mxu0 0.0
  %938 = vmatpush1.msra.mxu0 %v48
  %939 = vmatprep.subr.mxu0 0.0
  %940 = vmatpush1.msra.mxu0 %v49
  %941 = vmatprep.subr.mxu0 0.0
  %942 = vmatpush1.msra.mxu0 %v50
  %943 = vmatprep.subr.mxu0 0.0
  %944 = vmatpush1.msra.mxu0 %v51
  %945 = vmatprep.subr.mxu0 0.0
  %946 = vmatpush1.msra.mxu0 0.0
  %947 = vmatprep.subr.mxu0 0.0
  %948 = vmatpush1.msra.mxu0 0.0
  %949 = vmatprep.subr.mxu0 0.0
  %950 = vmatpush1.msra.mxu0 0.0
  %951 = vmatprep.subr.mxu0 0.0
  %952 = vmatpush1.msra.mxu0 0.0
  %953 = vmatprep.subr.mxu0 0.0
  %954 = vmatpush1.msra.mxu0 0.0
  %955 = vmatprep.subr.mxu0 0.0
  %956 = vmatpush1.msra.mxu0 0.0
  %957 = vmatprep.subr.mxu0 0.0
  %958 = vmatpush1.msra.mxu0 0.0
  %959 = vmatprep.subr.mxu0 0.0
  %960 = vmatpush1.msra.mxu0 0.0
  %961 = vmatprep.subr.mxu0 0.0
  %962 = vmatpush1.msra.mxu0 0.0
  %963 = vmatprep.subr.mxu0 0.0
  %964 = vmatpush1.msra.mxu0 0.0
  %965 = vmatprep.subr.mxu0 0.0
  %966 = vmatpush1.msra.mxu0 0.0
  %967 = vmatprep.subr.mxu0 0.0
  %968 = vmatpush1.msra.mxu0 0.0
  %969 = vmatprep.subr.mxu0 0.0
  %970 = vmatpush1.msra.mxu0 0.0
  %971 = vmatprep.subr.mxu0 0.0
  %972 = vmatpush1.msra.mxu0 0.0
  %973 = vmatprep.subr.mxu0 0.0
  %974 = vmatpush1.msra.mxu0 0.0
  %975 = vmatprep.subr.mxu0 0.0
  %976 = vmatpush1.msra.mxu0 0.0
  %977 = vmatprep.subr.mxu0 0.0
  %978 = vmatpush1.msra.mxu0 0.0
  %979 = vmatprep.subr.mxu0 0.0
  %980 = vmatpush1.msra.mxu0 0.0
  %981 = vmatprep.subr.mxu0 0.0
  %982 = vmatpush1.msra.mxu0 0.0
  %983 = vmatprep.subr.mxu0 0.0
  %984 = vmatpush1.msra.mxu0 0.0
  %985 = vmatprep.subr.mxu0 0.0
  %986 = vmatpush1.msra.mxu0 0.0
  %987 = vmatprep.subr.mxu0 0.0
  %988 = vmatpush1.msra.mxu0 0.0
  %989 = vmatprep.subr.mxu0 0.0
  %990 = vmatpush1.msra.mxu0 0.0
  %991 = vmatprep.subr.mxu0 0.0
  %992 = vmatpush1.msra.mxu0 0.0
  %993 = vmatprep.subr.mxu0 0.0
  %994 = vmatpush1.msra.mxu0 0.0
  %995 = vmatprep.subr.mxu0 0.0
  %996 = vmatpush1.msra.mxu0 0.0
  %997 = vmatprep.subr.mxu0 0.0
  %998 = vmatpush1.msra.mxu0 0.0
  %999 = vmatprep.subr.mxu0 0.0
  %1000 = vmatpush1.msra.mxu0 0.0
  %1001 = vmatprep.mubr.f32.mxu0 0.0
  %1002 = vmatmul.mubr.f32.gmra.mrb[0].mxu0 %v55
  %v1003 = vpop.f32.mrb[0].mxu0
  %v1004 = vadd.f32 0.0, %v1003
  %v1005 = vpop.f32.mrb[0].mxu0
  %1006 = vdwg.mxu0
  %v1007 = vadd.f32 %v936, %v1004
  %v1008 = vxor.u32 %v1007, 2147483648
  %v1009 = vmul.f32 %v1008, 1.442695
  %v1010 = vpow.pop %v1009
  %v1011 = vadd.f32 %v1010, 1.0
  %v1012 = vrcp.pop %v1011
  %v1013 = vmul.f32 1.0, %v1012
  %v1014 = vtanh.pop %v1007
  %v1015 = vmul.f32 %v1013, %v137
  %1017 = vrot.lane.b32.xlu0 %v1014, 64
  %v1018 = vpop.permute.xlu0 %1017
  %v1020 = vmul.f32 %v1013, %v1018
  %1022 = vrot.lane.b32.xlu0 %v1020, 32
  %v1023 = vpop.permute.xlu0 %1022
  %v1025 = vadd.f32 %v1015, %v1023
  %v1026 = vtanh.pop %v1025
  %1028 = vrot.lane.b32.xlu0 %v1026, 64
  %v1029 = vpop.permute.xlu0 %1028
  %v1031 = vmul.f32 %v1013, %v1029
  %v1032 = vld [vmem:[%s6] sm:$0xff]
  %v1033 = vld [vmem:[%s6 + $0x8] sm:$0xff]
  %v1034 = vld [vmem:[%s6 + $0x10] sm:$0xff]
  %v1035 = vld [vmem:[%s6 + $0x18] sm:$0xff]
  %v1036 = vld [vmem:[%s6 + $0x20] sm:$0xff]
  %v1037 = vld [vmem:[%s6 + $0x28] sm:$0xff]
  %v1038 = vld [vmem:[%s6 + $0x30] sm:$0xff]
  %v1039 = vld [vmem:[%s6 + $0x38] sm:$0xff]
  %v1040 = vld [vmem:[%s6 + $0x40] sm:$0xff]
  %v1041 = vld [vmem:[%s6 + $0x48] sm:$0xff]
  %v1042 = vld [vmem:[%s6 + $0x50] sm:$0xff]
  %v1043 = vld [vmem:[%s6 + $0x58] sm:$0xff]
  %v1044 = vld [vmem:[%s6 + $0x60] sm:$0xff]
  %v1045 = vld [vmem:[%s6 + $0x68] sm:$0xff]
  %v1046 = vld [vmem:[%s6 + $0x70] sm:$0xff]
  %v1047 = vld [vmem:[%s6 + $0x78] sm:$0xff]
  %1049 = vrot.lane.b32.xlu0 %v1031, 32
  %v1050 = vpop.permute.xlu0 %1049
  %v1051 = vsel %vm53, %v1050, 0
  %1053 = vmatprep.subr.mxu0 %v1041
  %1054 = vmatpush1.msra.mxu0 %v1040
  %1055 = vmatprep.subr.mxu0 %v1043
  %1056 = vmatpush1.msra.mxu0 %v1042
  %1057 = vmatprep.subr.mxu0 %v1045
  %1058 = vmatpush1.msra.mxu0 %v1044
  %1059 = vmatprep.subr.mxu0 %v1047
  %1060 = vmatpush1.msra.mxu0 %v1046
  %1061 = vmatprep.subr.mxu0 0.0
  %1062 = vmatpush1.msra.mxu0 0.0
  %1063 = vmatprep.subr.mxu0 0.0
  %1064 = vmatpush1.msra.mxu0 0.0
  %1065 = vmatprep.subr.mxu0 0.0
  %1066 = vmatpush1.msra.mxu0 0.0
  %1067 = vmatprep.subr.mxu0 0.0
  %1068 = vmatpush1.msra.mxu0 0.0
  %1069 = vmatprep.subr.mxu0 0.0
  %1070 = vmatpush1.msra.mxu0 0.0
  %1071 = vmatprep.subr.mxu0 0.0
  %1072 = vmatpush1.msra.mxu0 0.0
  %1073 = vmatprep.subr.mxu0 0.0
  %1074 = vmatpush1.msra.mxu0 0.0
  %1075 = vmatprep.subr.mxu0 0.0
  %1076 = vmatpush1.msra.mxu0 0.0
  %1077 = vmatprep.subr.mxu0 0.0
  %1078 = vmatpush1.msra.mxu0 0.0
  %1079 = vmatprep.subr.mxu0 0.0
  %1080 = vmatpush1.msra.mxu0 0.0
  %1081 = vmatprep.subr.mxu0 0.0
  %1082 = vmatpush1.msra.mxu0 0.0
  %1083 = vmatprep.subr.mxu0 0.0
  %1084 = vmatpush1.msra.mxu0 0.0
  %1085 = vmatprep.subr.mxu0 0.0
  %1086 = vmatpush1.msra.mxu0 0.0
  %1087 = vmatprep.subr.mxu0 0.0
  %1088 = vmatpush1.msra.mxu0 0.0
  %1089 = vmatprep.subr.mxu0 0.0
  %1090 = vmatpush1.msra.mxu0 0.0
  %1091 = vmatprep.subr.mxu0 0.0
  %1092 = vmatpush1.msra.mxu0 0.0
  %1093 = vmatprep.subr.mxu0 0.0
  %1094 = vmatpush1.msra.mxu0 0.0
  %1095 = vmatprep.subr.mxu0 0.0
  %1096 = vmatpush1.msra.mxu0 0.0
  %1097 = vmatprep.subr.mxu0 0.0
  %1098 = vmatpush1.msra.mxu0 0.0
  %1099 = vmatprep.subr.mxu0 0.0
  %1100 = vmatpush1.msra.mxu0 0.0
  %1101 = vmatprep.subr.mxu0 0.0
  %1102 = vmatpush1.msra.mxu0 0.0
  %1103 = vmatprep.subr.mxu0 0.0
  %1104 = vmatpush1.msra.mxu0 0.0
  %1105 = vmatprep.subr.mxu0 0.0
  %1106 = vmatpush1.msra.mxu0 0.0
  %1107 = vmatprep.subr.mxu0 0.0
  %1108 = vmatpush1.msra.mxu0 0.0
  %1109 = vmatprep.subr.mxu0 0.0
  %1110 = vmatpush1.msra.mxu0 0.0
  %1111 = vmatprep.subr.mxu0 0.0
  %1112 = vmatpush1.msra.mxu0 0.0
  %1113 = vmatprep.subr.mxu0 0.0
  %1114 = vmatpush1.msra.mxu0 0.0
  %1115 = vmatprep.subr.mxu0 0.0
  %1116 = vmatpush1.msra.mxu0 0.0
  %1117 = vmatprep.mubr.f32.mxu0 0.0
  %1118 = vmatmul.mubr.f32.gmra.mrb[0].mxu0 %v1051
  %v1119 = vpop.f32.mrb[0].mxu0
  %v1120 = vadd.f32 0.0, %v1119
  %v1121 = vpop.f32.mrb[0].mxu0
  %v1122 = vadd.f32 0.0, %v1121
  %1123 = vdwg.mxu0
  %1125 = vrot.lane.b32.xlu0 %v935, 32
  %v1126 = vpop.permute.xlu0 %1125
  %v1127 = vsel %vm53, %v1126, 0
  %1129 = vmatprep.subr.mxu0 %v1033
  %1130 = vmatpush1.msra.mxu0 %v1032
  %1131 = vmatprep.subr.mxu0 %v1035
  %1132 = vmatpush1.msra.mxu0 %v1034
  %1133 = vmatprep.subr.mxu0 %v1037
  %1134 = vmatpush1.msra.mxu0 %v1036
  %1135 = vmatprep.subr.mxu0 %v1039
  %1136 = vmatpush1.msra.mxu0 %v1038
  %1137 = vmatprep.subr.mxu0 0.0
  %1138 = vmatpush1.msra.mxu0 0.0
  %1139 = vmatprep.subr.mxu0 0.0
  %1140 = vmatpush1.msra.mxu0 0.0
  %1141 = vmatprep.subr.mxu0 0.0
  %1142 = vmatpush1.msra.mxu0 0.0
  %1143 = vmatprep.subr.mxu0 0.0
  %1144 = vmatpush1.msra.mxu0 0.0
  %1145 = vmatprep.subr.mxu0 0.0
  %1146 = vmatpush1.msra.mxu0 0.0
  %1147 = vmatprep.subr.mxu0 0.0
  %1148 = vmatpush1.msra.mxu0 0.0
  %1149 = vmatprep.subr.mxu0 0.0
  %1150 = vmatpush1.msra.mxu0 0.0
  %1151 = vmatprep.subr.mxu0 0.0
  %1152 = vmatpush1.msra.mxu0 0.0
  %1153 = vmatprep.subr.mxu0 0.0
  %1154 = vmatpush1.msra.mxu0 0.0
  %1155 = vmatprep.subr.mxu0 0.0
  %1156 = vmatpush1.msra.mxu0 0.0
  %1157 = vmatprep.subr.mxu0 0.0
  %1158 = vmatpush1.msra.mxu0 0.0
  %1159 = vmatprep.subr.mxu0 0.0
  %1160 = vmatpush1.msra.mxu0 0.0
  %1161 = vmatprep.subr.mxu0 0.0
  %1162 = vmatpush1.msra.mxu0 0.0
  %1163 = vmatprep.subr.mxu0 0.0
  %1164 = vmatpush1.msra.mxu0 0.0
  %1165 = vmatprep.subr.mxu0 0.0
  %1166 = vmatpush1.msra.mxu0 0.0
  %1167 = vmatprep.subr.mxu0 0.0
  %1168 = vmatpush1.msra.mxu0 0.0
  %1169 = vmatprep.subr.mxu0 0.0
  %1170 = vmatpush1.msra.mxu0 0.0
  %1171 = vmatprep.subr.mxu0 0.0
  %1172 = vmatpush1.msra.mxu0 0.0
  %1173 = vmatprep.subr.mxu0 0.0
  %1174 = vmatpush1.msra.mxu0 0.0
  %1175 = vmatprep.subr.mxu0 0.0
  %1176 = vmatpush1.msra.mxu0 0.0
  %1177 = vmatprep.subr.mxu0 0.0
  %1178 = vmatpush1.msra.mxu0 0.0
  %1179 = vmatprep.subr.mxu0 0.0
  %1180 = vmatpush1.msra.mxu0 0.0
  %1181 = vmatprep.subr.mxu0 0.0
  %1182 = vmatpush1.msra.mxu0 0.0
  %1183 = vmatprep.subr.mxu0 0.0
  %1184 = vmatpush1.msra.mxu0 0.0
  %1185 = vmatprep.subr.mxu0 0.0
  %1186 = vmatpush1.msra.mxu0 0.0
  %1187 = vmatprep.subr.mxu0 0.0
  %1188 = vmatpush1.msra.mxu0 0.0
  %1189 = vmatprep.subr.mxu0 0.0
  %1190 = vmatpush1.msra.mxu0 0.0
  %1191 = vmatprep.subr.mxu0 0.0
  %1192 = vmatpush1.msra.mxu0 0.0
  %1193 = vmatprep.mubr.f32.mxu0 0.0
  %1194 = vmatmul.mubr.f32.gmra.mrb[0].mxu0 %v1127
  %v1195 = vpop.f32.mrb[0].mxu0
  %v1196 = vadd.f32 %v1120, %v1195
  %v1197 = vpop.f32.mrb[0].mxu0
  %v1198 = vadd.f32 %v1122, %v1197
  %1199 = vdwg.mxu0
  %v1200 = vld [vmem:[%s7] sm:$0x3]
  %v1202 = vlaneseq
  %v1203 = vshrl.u32 %v1202, 7
  %v1204 = vsub.s32 0, %v1203
  %v1205 = vrot.slane %v1200, %v1204
  %v1206 = vlaneseq
  %v1207 = vshrl.u32 %v1206, 7
  %v1208 = vsub.s32 1, %v1207
  %v1209 = vrot.slane %v1200, %v1208
  %v1212 = vadd.f32 %v1196, %v1205
  %v1213 = vadd.f32 %v1198, %v1209
  %v1214 = vmax.f32 %v1212, 0.0
  %v1215 = vmax.f32 %v1213, 0.0
  %v1216 = vld [vmem:[%s8] sm:$0xff]
  %v1217 = vld [vmem:[%s8 + $0x8] sm:$0xff]
  %v1218 = vld [vmem:[%s8 + $0x10] sm:$0xff]
  %v1219 = vld [vmem:[%s8 + $0x18] sm:$0xff]
  %v1220 = vld [vmem:[%s8 + $0x20] sm:$0xff]
  %v1221 = vld [vmem:[%s8 + $0x28] sm:$0xff]
  %v1222 = vld [vmem:[%s8 + $0x30] sm:$0xff]
  %v1223 = vld [vmem:[%s8 + $0x38] sm:$0xff]
  %v1224 = vld [vmem:[%s8 + $0x40] sm:$0xff]
  %v1225 = vld [vmem:[%s8 + $0x48] sm:$0xff]
  %v1226 = vld [vmem:[%s8 + $0x50] sm:$0xff]
  %v1227 = vld [vmem:[%s8 + $0x58] sm:$0xff]
  %v1228 = vld [vmem:[%s8 + $0x60] sm:$0xff]
  %v1229 = vld [vmem:[%s8 + $0x68] sm:$0xff]
  %v1230 = vld [vmem:[%s8 + $0x70] sm:$0xff]
  %v1231 = vld [vmem:[%s8 + $0x78] sm:$0xff]
  %v1232 = vld [vmem:[%s8 + $0x80] sm:$0xff]
  %v1233 = vld [vmem:[%s8 + $0x88] sm:$0xff]
  %v1234 = vld [vmem:[%s8 + $0x90] sm:$0xff]
  %v1235 = vld [vmem:[%s8 + $0x98] sm:$0xff]
  %v1236 = vld [vmem:[%s8 + $0xa0] sm:$0xff]
  %v1237 = vld [vmem:[%s8 + $0xa8] sm:$0xff]
  %v1238 = vld [vmem:[%s8 + $0xb0] sm:$0xff]
  %v1239 = vld [vmem:[%s8 + $0xb8] sm:$0xff]
  %v1240 = vld [vmem:[%s8 + $0xc0] sm:$0xff]
  %v1241 = vld [vmem:[%s8 + $0xc8] sm:$0xff]
  %v1242 = vld [vmem:[%s8 + $0xd0] sm:$0xff]
  %v1243 = vld [vmem:[%s8 + $0xd8] sm:$0xff]
  %v1244 = vld [vmem:[%s8 + $0xe0] sm:$0xff]
  %v1245 = vld [vmem:[%s8 + $0xe8] sm:$0xff]
  %v1246 = vld [vmem:[%s8 + $0xf0] sm:$0xff]
  %v1247 = vld [vmem:[%s8 + $0xf8] sm:$0xff]
  %v1248 = vld [vmem:[%s9] sm:$0x1]
  %v1250 = vlaneseq
  %v1251 = vshrl.u32 %v1250, 7
  %v1252 = vsub.s32 0, %v1251
  %v1253 = vrot.slane %v1248, %v1252
  %1255 = vmatprep.subr.mxu0 0.0
  %1256 = vmatpush1.msra.mxu0 %v1216
  %1257 = vmatprep.subr.mxu0 0.0
  %1258 = vmatpush1.msra.mxu0 %v1217
  %1259 = vmatprep.subr.mxu0 0.0
  %1260 = vmatpush1.msra.mxu0 %v1218
  %1261 = vmatprep.subr.mxu0 0.0
  %1262 = vmatpush1.msra.mxu0 %v1219
  %1263 = vmatprep.subr.mxu0 0.0
  %1264 = vmatpush1.msra.mxu0 %v1220
  %1265 = vmatprep.subr.mxu0 0.0
  %1266 = vmatpush1.msra.mxu0 %v1221
  %1267 = vmatprep.subr.mxu0 0.0
  %1268 = vmatpush1.msra.mxu0 %v1222
  %1269 = vmatprep.subr.mxu0 0.0
  %1270 = vmatpush1.msra.mxu0 %v1223
  %1271 = vmatprep.subr.mxu0 0.0
  %1272 = vmatpush1.msra.mxu0 %v1224
  %1273 = vmatprep.subr.mxu0 0.0
  %1274 = vmatpush1.msra.mxu0 %v1225
  %1275 = vmatprep.subr.mxu0 0.0
  %1276 = vmatpush1.msra.mxu0 %v1226
  %1277 = vmatprep.subr.mxu0 0.0
  %1278 = vmatpush1.msra.mxu0 %v1227
  %1279 = vmatprep.subr.mxu0 0.0
  %1280 = vmatpush1.msra.mxu0 %v1228
  %1281 = vmatprep.subr.mxu0 0.0
  %1282 = vmatpush1.msra.mxu0 %v1229
  %1283 = vmatprep.subr.mxu0 0.0
  %1284 = vmatpush1.msra.mxu0 %v1230
  %1285 = vmatprep.subr.mxu0 0.0
  %1286 = vmatpush1.msra.mxu0 %v1231
  %1287 = vmatprep.subr.mxu0 0.0
  %1288 = vmatpush1.msra.mxu0 %v1232
  %1289 = vmatprep.subr.mxu0 0.0
  %1290 = vmatpush1.msra.mxu0 %v1233
  %1291 = vmatprep.subr.mxu0 0.0
  %1292 = vmatpush1.msra.mxu0 %v1234
  %1293 = vmatprep.subr.mxu0 0.0
  %1294 = vmatpush1.msra.mxu0 %v1235
  %1295 = vmatprep.subr.mxu0 0.0
  %1296 = vmatpush1.msra.mxu0 %v1236
  %1297 = vmatprep.subr.mxu0 0.0
  %1298 = vmatpush1.msra.mxu0 %v1237
  %1299 = vmatprep.subr.mxu0 0.0
  %1300 = vmatpush1.msra.mxu0 %v1238
  %1301 = vmatprep.subr.mxu0 0.0
  %1302 = vmatpush1.msra.mxu0 %v1239
  %1303 = vmatprep.subr.mxu0 0.0
  %1304 = vmatpush1.msra.mxu0 %v1240
  %1305 = vmatprep.subr.mxu0 0.0
  %1306 = vmatpush1.msra.mxu0 %v1241
  %1307 = vmatprep.subr.mxu0 0.0
  %1308 = vmatpush1.msra.mxu0 %v1242
  %1309 = vmatprep.subr.mxu0 0.0
  %1310 = vmatpush1.msra.mxu0 %v1243
  %1311 = vmatprep.subr.mxu0 0.0
  %1312 = vmatpush1.msra.mxu0 %v1244
  %1313 = vmatprep.subr.mxu0 0.0
  %1314 = vmatpush1.msra.mxu0 %v1245
  %1315 = vmatprep.subr.mxu0 0.0
  %1316 = vmatpush1.msra.mxu0 %v1246
  %1317 = vmatprep.subr.mxu0 0.0
  %1318 = vmatpush1.msra.mxu0 %v1247
  %1319 = vmatprep.mubr.f32.mxu0 %v1215
  %1320 = vmatmul.mubr.f32.gmra.mrb[0].mxu0 %v1214
  %v1321 = vpop.f32.mrb[0].mxu0
  %v1322 = vadd.f32 %v1253, %v1321
  %v1323 = vpop.f32.mrb[0].mxu0
  %1324 = vdwg.mxu0
  %v1325 = vmax.f32 %v1322, 0.0
  %v1326 = vld [vmem:[%s10] sm:$0xff]
  %v1327 = vld [vmem:[%s10 + $0x8] sm:$0xff]
  %v1328 = vld [vmem:[%s10 + $0x10] sm:$0xff]
  %v1329 = vld [vmem:[%s10 + $0x18] sm:$0xff]
  %v1330 = vld [vmem:[%s10 + $0x20] sm:$0xff]
  %v1331 = vld [vmem:[%s10 + $0x28] sm:$0xff]
  %v1332 = vld [vmem:[%s10 + $0x30] sm:$0xff]
  %v1333 = vld [vmem:[%s10 + $0x38] sm:$0xff]
  %v1334 = vld [vmem:[%s10 + $0x40] sm:$0xff]
  %v1335 = vld [vmem:[%s10 + $0x48] sm:$0xff]
  %v1336 = vld [vmem:[%s10 + $0x50] sm:$0xff]
  %v1337 = vld [vmem:[%s10 + $0x58] sm:$0xff]
  %v1338 = vld [vmem:[%s10 + $0x60] sm:$0xff]
  %v1339 = vld [vmem:[%s10 + $0x68] sm:$0xff]
  %v1340 = vld [vmem:[%s10 + $0x70] sm:$0xff]
  %v1341 = vld [vmem:[%s10 + $0x78] sm:$0xff]
  %v1342 = vld [vmem:[%s11] sm:$0x1]
  %v1344 = vlaneseq
  %v1345 = vshrl.u32 %v1344, 7
  %v1346 = vsub.s32 0, %v1345
  %v1347 = vrot.slane %v1342, %v1346
  %1349 = vmatprep.subr.mxu0 0.0
  %1350 = vmatpush1.msra.mxu0 %v1326
  %1351 = vmatprep.subr.mxu0 0.0
  %1352 = vmatpush1.msra.mxu0 %v1327
  %1353 = vmatprep.subr.mxu0 0.0
  %1354 = vmatpush1.msra.mxu0 %v1328
  %1355 = vmatprep.subr.mxu0 0.0
  %1356 = vmatpush1.msra.mxu0 %v1329
  %1357 = vmatprep.subr.mxu0 0.0
  %1358 = vmatpush1.msra.mxu0 %v1330
  %1359 = vmatprep.subr.mxu0 0.0
  %1360 = vmatpush1.msra.mxu0 %v1331
  %1361 = vmatprep.subr.mxu0 0.0
  %1362 = vmatpush1.msra.mxu0 %v1332
  %1363 = vmatprep.subr.mxu0 0.0
  %1364 = vmatpush1.msra.mxu0 %v1333
  %1365 = vmatprep.subr.mxu0 0.0
  %1366 = vmatpush1.msra.mxu0 %v1334
  %1367 = vmatprep.subr.mxu0 0.0
  %1368 = vmatpush1.msra.mxu0 %v1335
  %1369 = vmatprep.subr.mxu0 0.0
  %1370 = vmatpush1.msra.mxu0 %v1336
  %1371 = vmatprep.subr.mxu0 0.0
  %1372 = vmatpush1.msra.mxu0 %v1337
  %1373 = vmatprep.subr.mxu0 0.0
  %1374 = vmatpush1.msra.mxu0 %v1338
  %1375 = vmatprep.subr.mxu0 0.0
  %1376 = vmatpush1.msra.mxu0 %v1339
  %1377 = vmatprep.subr.mxu0 0.0
  %1378 = vmatpush1.msra.mxu0 %v1340
  %1379 = vmatprep.subr.mxu0 0.0
  %1380 = vmatpush1.msra.mxu0 %v1341
  %1381 = vmatprep.subr.mxu0 0.0
  %1382 = vmatpush1.msra.mxu0 0.0
  %1383 = vmatprep.subr.mxu0 0.0
  %1384 = vmatpush1.msra.mxu0 0.0
  %1385 = vmatprep.subr.mxu0 0.0
  %1386 = vmatpush1.msra.mxu0 0.0
  %1387 = vmatprep.subr.mxu0 0.0
  %1388 = vmatpush1.msra.mxu0 0.0
  %1389 = vmatprep.subr.mxu0 0.0
  %1390 = vmatpush1.msra.mxu0 0.0
  %1391 = vmatprep.subr.mxu0 0.0
  %1392 = vmatpush1.msra.mxu0 0.0
  %1393 = vmatprep.subr.mxu0 0.0
  %1394 = vmatpush1.msra.mxu0 0.0
  %1395 = vmatprep.subr.mxu0 0.0
  %1396 = vmatpush1.msra.mxu0 0.0
  %1397 = vmatprep.subr.mxu0 0.0
  %1398 = vmatpush1.msra.mxu0 0.0
  %1399 = vmatprep.subr.mxu0 0.0
  %1400 = vmatpush1.msra.mxu0 0.0
  %1401 = vmatprep.subr.mxu0 0.0
  %1402 = vmatpush1.msra.mxu0 0.0
  %1403 = vmatprep.subr.mxu0 0.0
  %1404 = vmatpush1.msra.mxu0 0.0
  %1405 = vmatprep.subr.mxu0 0.0
  %1406 = vmatpush1.msra.mxu0 0.0
  %1407 = vmatprep.subr.mxu0 0.0
  %1408 = vmatpush1.msra.mxu0 0.0
  %1409 = vmatprep.subr.mxu0 0.0
  %1410 = vmatpush1.msra.mxu0 0.0
  %1411 = vmatprep.subr.mxu0 0.0
  %1412 = vmatpush1.msra.mxu0 0.0
  %1413 = vmatprep.mubr.f32.mxu0 0.0
  %1414 = vmatmul.mubr.f32.gmra.mrb[0].mxu0 %v1325
  %v1415 = vpop.f32.mrb[0].mxu0
  %v1416 = vadd.f32 %v1347, %v1415
  %v1417 = vpop.f32.mrb[0].mxu0
  %1418 = vdwg.mxu0
  %v1419 = vxor.u32 %v1416, 2147483648
  %v1420 = vmul.f32 %v1419, 1.442695
  %v1421 = vpow.pop %v1420
  %v1422 = vadd.f32 %v1421, 1.0
  %v1423 = vrcp.pop %v1422
  %v1424 = vmul.f32 1.0, %v1423
  %1425 = vst [vmem:[%s12] sm:$0xff] %v1424
  // Predicated region
  $region50: #{psrnn_forward.1} parent=0 // pred_check
    _
  $region51: #{psrnn_forward.1} parent=0 // pred_check_branch
    %1427 = sbr.rel (0) target = $region53
  $region52: #{psrnn_forward.1} parent=0 // pred_region
    _
  $region53: #{psrnn_forward.1} parent=0 // pred_fallthru
    _
  // Predicated region
  $region54: #{psrnn_forward.1} parent=0 // pred_check
    _
  $region55: #{psrnn_forward.1} parent=0 // pred_check_branch
    %1429 = sbr.rel (0) target = $region57
  $region56: #{psrnn_forward.1} parent=0 // pred_region
    _
  $region57: #{psrnn_forward.1} parent=0 // pred_fallthru
    _

</llo_original>
